<compile_context>
chip_gen: v6e
topology: v6e:2x2x1
jax: 0.10.0
libtpu: 0.0.40
codegen_flags: <defaults>
</compile_context>

<pallas_src>
import jax
import jax.numpy as jnp
from jax.experimental import pallas as pl
from jax.experimental.pallas import tpu as pltpu


def encoder_gru_kernel(ids_ref, emb_ref, w_ih_ref, w_hh_ref, b_ih_ref, b_hh_ref,
                       h0_ref, out_ref, h_ref):
    """One grid step == one EncoderRNN.forward() call (one ingredient token).

    ids_ref : (1, B, 1) int32   token ids for this timestep
    emb_ref : (V, W)            embedding table            (resident)
    w_ih_ref: (2, 3, W, H)      per-direction, per-gate input weights (resident)
    w_hh_ref: (2, 3, H, H)      per-direction, per-gate hidden weights (resident)
    b_ih_ref: (2, 3, 1, H)      input biases               (resident)
    b_hh_ref: (2, 3, 1, H)      hidden biases              (resident)
    h0_ref  : (2, B, H)         initial hidden             (resident)
    out_ref : (1, B, 2H)        encoder_outputs[t]
    h_ref   : (2, B, H)         final hidden; doubles as the carried GRU state
    """
    t = pl.program_id(0)
    B = ids_ref.shape[1]
    V, W = emb_ref.shape
    H = h0_ref.shape[2]

    @pl.when(t == 0)
    def _():
        h_ref[...] = h0_ref[...]

    # --- embedding lookup: one-hot matmul on the MXU (V = 128 lanes) ---
    ids_b1 = ids_ref[0]                                          # (B, 1) int32
    vocab_iota = jax.lax.broadcasted_iota(jnp.int32, (B, V), 1)  # (B, V)
    onehot = jnp.where(vocab_iota == ids_b1, 1.0, 0.0).astype(jnp.float32)
    x = jnp.dot(onehot, emb_ref[...], preferred_element_type=jnp.float32)  # (B, W)
    # TODO(synk): nn.GRU's inter-layer dropout only applies for num_gru_layers>1
    # and in training mode; eval-mode single-layer forward has no dropout.

    # --- bidirectional GRU cell (both directions step on the same token,
    #     exactly like the seq_len==1 calls inside forward_all) ---
    h_new = []
    for d in range(2):                                # static unroll over directions
        h = h_ref[d]                                  # (B, H)
        gi_r = jnp.dot(x, w_ih_ref[d, 0], preferred_element_type=jnp.float32) + b_ih_ref[d, 0]
        gi_z = jnp.dot(x, w_ih_ref[d, 1], preferred_element_type=jnp.float32) + b_ih_ref[d, 1]
        gi_n = jnp.dot(x, w_ih_ref[d, 2], preferred_element_type=jnp.float32) + b_ih_ref[d, 2]
        gh_r = jnp.dot(h, w_hh_ref[d, 0], preferred_element_type=jnp.float32) + b_hh_ref[d, 0]
        gh_z = jnp.dot(h, w_hh_ref[d, 1], preferred_element_type=jnp.float32) + b_hh_ref[d, 1]
        gh_n = jnp.dot(h, w_hh_ref[d, 2], preferred_element_type=jnp.float32) + b_hh_ref[d, 2]
        r = jax.nn.sigmoid(gi_r + gh_r)
        z = jax.nn.sigmoid(gi_z + gh_z)
        n = jnp.tanh(gi_n + r * gh_n)
        hd = (1.0 - z) * n + z * h
        h_ref[d] = hd
        h_new.append(hd)

    # lane-dense (B, 2H = 128) store
    out_ref[0] = jnp.concatenate(h_new, axis=-1)


def encoder_rnn_forward_all(input_tensor, hidden0, emb_table, w_ih, w_hh, b_ih, b_hh):
    """Fused equivalent of EncoderRNN.forward_all's time loop (minus the random
    ingredient shuffle, which is host-side preprocessing).

    input_tensor: (B, max_ingr) int32 token ids
    hidden0:      (2, B, H) initial hidden (initHidden -> zeros)
    Returns:
      encoder_outputs: (max_ingr, B, 2H)
      hidden_final:    (2, B, H)                (what forward() returns)
      encoder_hidden:  (1, B, 2H)               (forward_all's bidirectional concat)
    """
    B_real, T = input_tensor.shape
    V, W = emb_table.shape
    H = hidden0.shape[-1]

    # Pad batch to a multiple of 8 sublanes (f32) so vregs aren't half empty.
    B = max(8, ((B_real + 7) // 8) * 8)
    ids_tb = jnp.transpose(input_tensor).astype(jnp.int32)               # (T, B_real)
    ids = jnp.zeros((T, B, 1), jnp.int32).at[:, :B_real, 0].set(ids_tb)  # (T, B, 1)
    h0 = jnp.zeros((2, B, H), jnp.float32).at[:, :B_real, :].set(hidden0)

    grid_spec = pltpu.PrefetchScalarGridSpec(
        num_scalar_prefetch=0,
        grid=(T,),
        in_specs=[
            pl.BlockSpec((1, B, 1), lambda t: (t, 0, 0)),        # token ids, per step
            pl.BlockSpec((V, W), lambda t: (0, 0)),              # embedding (resident)
            pl.BlockSpec((2, 3, W, H), lambda t: (0, 0, 0, 0)),  # W_ih (resident)
            pl.BlockSpec((2, 3, H, H), lambda t: (0, 0, 0, 0)),  # W_hh (resident)
            pl.BlockSpec((2, 3, 1, H), lambda t: (0, 0, 0, 0)),  # b_ih (resident)
            pl.BlockSpec((2, 3, 1, H), lambda t: (0, 0, 0, 0)),  # b_hh (resident)
            pl.BlockSpec((2, B, H), lambda t: (0, 0, 0)),        # initial hidden
        ],
        out_specs=(
            pl.BlockSpec((1, B, 2 * H), lambda t: (t, 0, 0)),    # encoder_outputs[t]
            pl.BlockSpec((2, B, H), lambda t: (0, 0, 0)),        # final hidden (carried)
        ),
    )

    enc_outs, h_final = pl.pallas_call(
        encoder_gru_kernel,
        grid_spec=grid_spec,
        out_shape=(
            jax.ShapeDtypeStruct((T, B, 2 * H), jnp.float32),
            jax.ShapeDtypeStruct((2, B, H), jnp.float32),
        ),
        compiler_params=pltpu.CompilerParams(
            # time axis is a true recurrence -> sequential
            dimension_semantics=("arbitrary",),
        ),
    )(ids, emb_table, w_ih, w_hh, b_ih, b_hh, h0)

    enc_outs = enc_outs[:, :B_real, :]
    h_final = h_final[:, :B_real, :]
    # forward_all post-processing (single bidirectional layer case)
    encoder_hidden = jnp.concatenate([h_final[0], h_final[1]], axis=1)[None]
    # TODO(synk): forward_all's data-dependent torch.randperm shuffle of
    # ingredients before the pad token is host-side preprocessing, not ported.
    # TODO(synk): num_gru_layers > 1 (stacked GRU) not implemented; single
    # bidirectional layer only.
    return enc_outs, h_final, encoder_hidden


def encoder_rnn_forward(input_ids, hidden, emb_table, w_ih, w_hh, b_ih, b_hh):
    """Single-step EncoderRNN.forward(): input_ids (B,), hidden (2, B, H).
    Returns output (1, B, 2H) and hidden (2, B, H)."""
    enc_outs, h_final, _ = encoder_rnn_forward_all(
        input_ids[:, None], hidden, emb_table, w_ih, w_hh, b_ih, b_hh)
    return enc_outs, h_final


# ---------------- pure-JAX reference (for correctness check) ----------------
def _gru_cell_ref(x, h, w_ih_d, w_hh_d, b_ih_d, b_hh_d):
    gi = [x @ w_ih_d[g] + b_ih_d[g] for g in range(3)]
    gh = [h @ w_hh_d[g] + b_hh_d[g] for g in range(3)]
    r = jax.nn.sigmoid(gi[0] + gh[0])
    z = jax.nn.sigmoid(gi[1] + gh[1])
    n = jnp.tanh(gi[2] + r * gh[2])
    return (1.0 - z) * n + z * h


def _encoder_ref(ids_tb, h0, emb_table, w_ih, w_hh, b_ih, b_hh):
    T = ids_tb.shape[0]
    h = h0
    outs = []
    for t in range(T):
        x = emb_table[ids_tb[t]]
        h_new = [_gru_cell_ref(x, h[d], w_ih[d], w_hh[d], b_ih[d], b_hh[d])
                 for d in range(2)]
        h = jnp.stack(h_new, axis=0)
        outs.append(jnp.concatenate(h_new, axis=-1))
    return jnp.stack(outs, axis=0), h


if __name__ == "__main__":
    # Small shapes consistent with the module.
    batch = 6            # deliberately not a multiple of 8 (wrapper pads to 8)
    hidden_size = 64     # args.hidden_size  (2H = 128 -> lane-dense outputs)
    word_embed = 32      # embedding_size
    max_ingr = 8         # args.max_ingr
    vocab = 128          # input_size (vocab)

    key = jax.random.PRNGKey(0)
    k_ids, k_emb, k_wih, k_whh, k_bih, k_bhh = jax.random.split(key, 6)

    input_tensor = jax.random.randint(k_ids, (batch, max_ingr), 0, vocab, jnp.int32)
    hidden0 = jnp.zeros((2, batch, hidden_size), jnp.float32)  # initHidden()
    emb_table = jax.random.normal(k_emb, (vocab, word_embed), jnp.float32)

    bound = 1.0 / jnp.sqrt(jnp.float32(hidden_size))
    w_ih = jax.random.uniform(k_wih, (2, 3, word_embed, hidden_size), jnp.float32,
                              minval=-bound, maxval=bound)
    w_hh = jax.random.uniform(k_whh, (2, 3, hidden_size, hidden_size), jnp.float32,
                              minval=-bound, maxval=bound)
    b_ih = jax.random.uniform(k_bih, (2, 3, 1, hidden_size), jnp.float32,
                              minval=-bound, maxval=bound)
    b_hh = jax.random.uniform(k_bhh, (2, 3, 1, hidden_size), jnp.float32,
                              minval=-bound, maxval=bound)

    # Fused whole-sequence encode (forward_all's loop in one pallas_call).
    enc_outs, h_final, enc_hidden = encoder_rnn_forward_all(
        input_tensor, hidden0, emb_table, w_ih, w_hh, b_ih, b_hh)
    jax.block_until_ready((enc_outs, h_final, enc_hidden))

    # Single-step forward() (grid of size 1 through the same kernel).
    step_out, step_hidden = encoder_rnn_forward(
        input_tensor[:, 0], hidden0, emb_table, w_ih, w_hh, b_ih, b_hh)
    jax.block_until_ready((step_out, step_hidden))

    # Reference check.
    ids_tb = jnp.transpose(input_tensor)
    ref_outs, ref_h = _encoder_ref(ids_tb, hidden0, emb_table, w_ih, w_hh, b_ih, b_hh)
    ref_hidden = jnp.concatenate([ref_h[0], ref_h[1]], axis=1)[None]

    assert enc_outs.shape == (max_ingr, batch, 2 * hidden_size)
    assert h_final.shape == (2, batch, hidden_size)
    assert enc_hidden.shape == (1, batch, 2 * hidden_size)
    assert step_out.shape == (1, batch, 2 * hidden_size)
    assert step_hidden.shape == (2, batch, hidden_size)

    tol = dict(atol=5e-2, rtol=5e-2)  # MXU default-precision f32 vs XLA reference
    assert jnp.allclose(enc_outs, ref_outs, **tol)
    assert jnp.allclose(h_final, ref_h, **tol)
    assert jnp.allclose(enc_hidden, ref_hidden, **tol)
    assert jnp.allclose(step_out[0], ref_outs[0], **tol)

    print("KERNEL_OK")
</pallas_src>

<mosaic_0001>
module attributes {stable_mosaic.version = 11 : i64} {
  func.func @encoder_gru_kernel(%arg0: i32, %arg1: memref<1x8x1xi32, #tpu.memory_space<vmem>>, %arg2: memref<128x32xf32, #tpu.memory_space<vmem>>, %arg3: memref<2x3x32x64xf32, #tpu.memory_space<vmem>>, %arg4: memref<2x3x64x64xf32, #tpu.memory_space<vmem>>, %arg5: memref<2x3x1x64xf32, #tpu.memory_space<vmem>>, %arg6: memref<2x3x1x64xf32, #tpu.memory_space<vmem>>, %arg7: memref<2x8x64xf32, #tpu.memory_space<vmem>>, %arg8: memref<1x8x128xf32, #tpu.memory_space<vmem>>, %arg9: memref<2x8x64xf32, #tpu.memory_space<vmem>>) attributes {dimension_semantics = [#tpu.dimension_semantics<arbitrary>], iteration_bounds = array<i64: 8>, scalar_prefetch = 0 : i64, scratch_operands = 0 : i64, tpu.core_type = #tpu.core_type<tc>, window_params = [{transform_indices = @transform_0, window_bounds = array<i64: 1, 8, 1>}, {pipeline_mode = #tpu.pipeline_mode<synchronous>, transform_indices = @transform_1, window_bounds = array<i64: 128, 32>}, {pipeline_mode = #tpu.pipeline_mode<synchronous>, transform_indices = @transform_2, window_bounds = array<i64: 2, 3, 32, 64>}, {pipeline_mode = #tpu.pipeline_mode<synchronous>, transform_indices = @transform_3, window_bounds = array<i64: 2, 3, 64, 64>}, {pipeline_mode = #tpu.pipeline_mode<synchronous>, transform_indices = @transform_4, window_bounds = array<i64: 2, 3, 1, 64>}, {pipeline_mode = #tpu.pipeline_mode<synchronous>, transform_indices = @transform_5, window_bounds = array<i64: 2, 3, 1, 64>}, {pipeline_mode = #tpu.pipeline_mode<synchronous>, transform_indices = @transform_6, window_bounds = array<i64: 2, 8, 64>}, {transform_indices = @transform_7, window_bounds = array<i64: 1, 8, 128>}, {pipeline_mode = #tpu.pipeline_mode<synchronous>, transform_indices = @transform_8, window_bounds = array<i64: 2, 8, 64>}]} {
    %c0_i32 = arith.constant 0 : i32
    %0 = arith.cmpi eq, %arg0, %c0_i32 : i32
    %1 = arith.extui %0 : i1 to i32
    %c0_i32_0 = arith.constant 0 : i32
    %2 = arith.cmpi ne, %1, %c0_i32_0 : i32
    scf.if %2 {
      %c0_134 = arith.constant 0 : index
      %c0_135 = arith.constant 0 : index
      %c0_136 = arith.constant 0 : index
      %151 = vector.load %arg7[%c0_134, %c0_135, %c0_136] : memref<2x8x64xf32, #tpu.memory_space<vmem>>, vector<2x8x64xf32>
      %c0_137 = arith.constant 0 : index
      %c0_138 = arith.constant 0 : index
      %c0_139 = arith.constant 0 : index
      %152 = vector.load %arg9[%c0_137, %c0_138, %c0_139] : memref<2x8x64xf32, #tpu.memory_space<vmem>>, vector<2x8x64xf32>
      tpu.vector_store %arg9[%c0_137, %c0_138, %c0_139], %151 {strides = array<i32>} : memref<2x8x64xf32, #tpu.memory_space<vmem>>, vector<2x8x64xf32>,
    } else {
    }
    %c0 = arith.constant 0 : index
    %c0_1 = arith.constant 0 : index
    %c0_2 = arith.constant 0 : index
    %3 = vector.load %arg1[%c0, %c0_1, %c0_2] : memref<1x8x1xi32, #tpu.memory_space<vmem>>, vector<1x8x1xi32>
    %4 = vector.shape_cast %3 : vector<1x8x1xi32> to vector<8x1xi32>
    %5 = tpu.iota {dimensions = array<i32: 1>} : vector<8x128xi32>
    %6 = vector.broadcast %4 : vector<8x1xi32> to vector<8x128xi32>
    %7 = arith.cmpi eq, %5, %6 : vector<8x128xi32>
    %cst = arith.constant 1.000000e+00 : f32
    %cst_3 = arith.constant 0.000000e+00 : f32
    %8 = vector.broadcast %cst : f32 to vector<8x128xf32>
    %9 = vector.broadcast %cst_3 : f32 to vector<8x128xf32>
    %10 = arith.select %7, %8, %9 : vector<8x128xi1>, vector<8x128xf32>
    %c0_4 = arith.constant 0 : index
    %c0_5 = arith.constant 0 : index
    %11 = vector.load %arg2[%c0_4, %c0_5] : memref<128x32xf32, #tpu.memory_space<vmem>>, vector<128x32xf32>
    %cst_6 = arith.constant dense<0.000000e+00> : vector<8x32xf32>
    %12 = tpu.matmul %10, %11, %cst_6 {dimension_numbers = #tpu.dot_dimension_numbers<[1], [0], [0], [1], [0, 0, 1, 1], [], []>} : vector<8x128xf32>, vector<128x32xf32>, vector<8x32xf32> -> vector<8x32xf32>
    %c0_7 = arith.constant 0 : index
    %c0_8 = arith.constant 0 : index
    %c0_9 = arith.constant 0 : index
    %13 = vector.load %arg9[%c0_7, %c0_8, %c0_9] : memref<2x8x64xf32, #tpu.memory_space<vmem>>, vector<1x8x64xf32>
    %14 = vector.shape_cast %13 : vector<1x8x64xf32> to vector<8x64xf32>
    %c0_10 = arith.constant 0 : index
    %c0_11 = arith.constant 0 : index
    %c0_12 = arith.constant 0 : index
    %c0_13 = arith.constant 0 : index
    %15 = vector.load %arg3[%c0_10, %c0_11, %c0_12, %c0_13] : memref<2x3x32x64xf32, #tpu.memory_space<vmem>>, vector<1x1x32x64xf32>
    %16 = vector.shape_cast %15 : vector<1x1x32x64xf32> to vector<32x64xf32>
    %cst_14 = arith.constant dense<0.000000e+00> : vector<8x64xf32>
    %17 = tpu.matmul %12, %16, %cst_14 {dimension_numbers = #tpu.dot_dimension_numbers<[1], [0], [0], [1], [0, 0, 1, 1], [], []>} : vector<8x32xf32>, vector<32x64xf32>, vector<8x64xf32> -> vector<8x64xf32>
    %c0_15 = arith.constant 0 : index
    %c0_16 = arith.constant 0 : index
    %c0_17 = arith.constant 0 : index
    %c0_18 = arith.constant 0 : index
    %18 = vector.load %arg5[%c0_15, %c0_16, %c0_17, %c0_18] : memref<2x3x1x64xf32, #tpu.memory_space<vmem>>, vector<1x1x1x64xf32>
    %19 = vector.shape_cast %18 : vector<1x1x1x64xf32> to vector<1x64xf32>
    %20 = vector.broadcast %19 : vector<1x64xf32> to vector<8x64xf32>
    %21 = arith.addf %17, %20 : vector<8x64xf32>
    %c0_19 = arith.constant 0 : index
    %c1 = arith.constant 1 : index
    %c0_20 = arith.constant 0 : index
    %c0_21 = arith.constant 0 : index
    %22 = vector.load %arg3[%c0_19, %c1, %c0_20, %c0_21] : memref<2x3x32x64xf32, #tpu.memory_space<vmem>>, vector<1x1x32x64xf32>
    %23 = vector.shape_cast %22 : vector<1x1x32x64xf32> to vector<32x64xf32>
    %cst_22 = arith.constant dense<0.000000e+00> : vector<8x64xf32>
    %24 = tpu.matmul %12, %23, %cst_22 {dimension_numbers = #tpu.dot_dimension_numbers<[1], [0], [0], [1], [0, 0, 1, 1], [], []>} : vector<8x32xf32>, vector<32x64xf32>, vector<8x64xf32> -> vector<8x64xf32>
    %c0_23 = arith.constant 0 : index
    %c1_24 = arith.constant 1 : index
    %c0_25 = arith.constant 0 : index
    %c0_26 = arith.constant 0 : index
    %25 = vector.load %arg5[%c0_23, %c1_24, %c0_25, %c0_26] : memref<2x3x1x64xf32, #tpu.memory_space<vmem>>, vector<1x1x1x64xf32>
    %26 = vector.shape_cast %25 : vector<1x1x1x64xf32> to vector<1x64xf32>
    %27 = vector.broadcast %26 : vector<1x64xf32> to vector<8x64xf32>
    %28 = arith.addf %24, %27 : vector<8x64xf32>
    %c0_27 = arith.constant 0 : index
    %c2 = arith.constant 2 : index
    %c0_28 = arith.constant 0 : index
    %c0_29 = arith.constant 0 : index
    %29 = vector.load %arg3[%c0_27, %c2, %c0_28, %c0_29] : memref<2x3x32x64xf32, #tpu.memory_space<vmem>>, vector<1x1x32x64xf32>
    %30 = vector.shape_cast %29 : vector<1x1x32x64xf32> to vector<32x64xf32>
    %cst_30 = arith.constant dense<0.000000e+00> : vector<8x64xf32>
    %31 = tpu.matmul %12, %30, %cst_30 {dimension_numbers = #tpu.dot_dimension_numbers<[1], [0], [0], [1], [0, 0, 1, 1], [], []>} : vector<8x32xf32>, vector<32x64xf32>, vector<8x64xf32> -> vector<8x64xf32>
    %c0_31 = arith.constant 0 : index
    %c2_32 = arith.constant 2 : index
    %c0_33 = arith.constant 0 : index
    %c0_34 = arith.constant 0 : index
    %32 = vector.load %arg5[%c0_31, %c2_32, %c0_33, %c0_34] : memref<2x3x1x64xf32, #tpu.memory_space<vmem>>, vector<1x1x1x64xf32>
    %33 = vector.shape_cast %32 : vector<1x1x1x64xf32> to vector<1x64xf32>
    %34 = vector.broadcast %33 : vector<1x64xf32> to vector<8x64xf32>
    %35 = arith.addf %31, %34 : vector<8x64xf32>
    %c0_35 = arith.constant 0 : index
    %c0_36 = arith.constant 0 : index
    %c0_37 = arith.constant 0 : index
    %c0_38 = arith.constant 0 : index
    %36 = vector.load %arg4[%c0_35, %c0_36, %c0_37, %c0_38] : memref<2x3x64x64xf32, #tpu.memory_space<vmem>>, vector<1x1x64x64xf32>
    %37 = vector.shape_cast %36 : vector<1x1x64x64xf32> to vector<64x64xf32>
    %cst_39 = arith.constant dense<0.000000e+00> : vector<8x64xf32>
    %38 = tpu.matmul %14, %37, %cst_39 {dimension_numbers = #tpu.dot_dimension_numbers<[1], [0], [0], [1], [0, 0, 1, 1], [], []>} : vector<8x64xf32>, vector<64x64xf32>, vector<8x64xf32> -> vector<8x64xf32>
    %c0_40 = arith.constant 0 : index
    %c0_41 = arith.constant 0 : index
    %c0_42 = arith.constant 0 : index
    %c0_43 = arith.constant 0 : index
    %39 = vector.load %arg6[%c0_40, %c0_41, %c0_42, %c0_43] : memref<2x3x1x64xf32, #tpu.memory_space<vmem>>, vector<1x1x1x64xf32>
    %40 = vector.shape_cast %39 : vector<1x1x1x64xf32> to vector<1x64xf32>
    %41 = vector.broadcast %40 : vector<1x64xf32> to vector<8x64xf32>
    %42 = arith.addf %38, %41 : vector<8x64xf32>
    %c0_44 = arith.constant 0 : index
    %c1_45 = arith.constant 1 : index
    %c0_46 = arith.constant 0 : index
    %c0_47 = arith.constant 0 : index
    %43 = vector.load %arg4[%c0_44, %c1_45, %c0_46, %c0_47] : memref<2x3x64x64xf32, #tpu.memory_space<vmem>>, vector<1x1x64x64xf32>
    %44 = vector.shape_cast %43 : vector<1x1x64x64xf32> to vector<64x64xf32>
    %cst_48 = arith.constant dense<0.000000e+00> : vector<8x64xf32>
    %45 = tpu.matmul %14, %44, %cst_48 {dimension_numbers = #tpu.dot_dimension_numbers<[1], [0], [0], [1], [0, 0, 1, 1], [], []>} : vector<8x64xf32>, vector<64x64xf32>, vector<8x64xf32> -> vector<8x64xf32>
    %c0_49 = arith.constant 0 : index
    %c1_50 = arith.constant 1 : index
    %c0_51 = arith.constant 0 : index
    %c0_52 = arith.constant 0 : index
    %46 = vector.load %arg6[%c0_49, %c1_50, %c0_51, %c0_52] : memref<2x3x1x64xf32, #tpu.memory_space<vmem>>, vector<1x1x1x64xf32>
    %47 = vector.shape_cast %46 : vector<1x1x1x64xf32> to vector<1x64xf32>
    %48 = vector.broadcast %47 : vector<1x64xf32> to vector<8x64xf32>
    %49 = arith.addf %45, %48 : vector<8x64xf32>
    %c0_53 = arith.constant 0 : index
    %c2_54 = arith.constant 2 : index
    %c0_55 = arith.constant 0 : index
    %c0_56 = arith.constant 0 : index
    %50 = vector.load %arg4[%c0_53, %c2_54, %c0_55, %c0_56] : memref<2x3x64x64xf32, #tpu.memory_space<vmem>>, vector<1x1x64x64xf32>
    %51 = vector.shape_cast %50 : vector<1x1x64x64xf32> to vector<64x64xf32>
    %cst_57 = arith.constant dense<0.000000e+00> : vector<8x64xf32>
    %52 = tpu.matmul %14, %51, %cst_57 {dimension_numbers = #tpu.dot_dimension_numbers<[1], [0], [0], [1], [0, 0, 1, 1], [], []>} : vector<8x64xf32>, vector<64x64xf32>, vector<8x64xf32> -> vector<8x64xf32>
    %c0_58 = arith.constant 0 : index
    %c2_59 = arith.constant 2 : index
    %c0_60 = arith.constant 0 : index
    %c0_61 = arith.constant 0 : index
    %53 = vector.load %arg6[%c0_58, %c2_59, %c0_60, %c0_61] : memref<2x3x1x64xf32, #tpu.memory_space<vmem>>, vector<1x1x1x64xf32>
    %54 = vector.shape_cast %53 : vector<1x1x1x64xf32> to vector<1x64xf32>
    %55 = vector.broadcast %54 : vector<1x64xf32> to vector<8x64xf32>
    %56 = arith.addf %52, %55 : vector<8x64xf32>
    %57 = arith.addf %21, %42 : vector<8x64xf32>
    %58 = arith.negf %57 : vector<8x64xf32>
    %59 = math.exp %58 : vector<8x64xf32>
    %cst_62 = arith.constant 1.000000e+00 : f32
    %60 = vector.broadcast %cst_62 : f32 to vector<8x64xf32>
    %61 = arith.addf %60, %59 : vector<8x64xf32>
    %62 = arith.divf %60, %61 : vector<8x64xf32>
    %63 = arith.addf %28, %49 : vector<8x64xf32>
    %64 = arith.negf %63 : vector<8x64xf32>
    %65 = math.exp %64 : vector<8x64xf32>
    %cst_63 = arith.constant 1.000000e+00 : f32
    %66 = vector.broadcast %cst_63 : f32 to vector<8x64xf32>
    %67 = arith.addf %66, %65 : vector<8x64xf32>
    %68 = arith.divf %66, %67 : vector<8x64xf32>
    %69 = arith.mulf %62, %56 : vector<8x64xf32>
    %70 = arith.addf %35, %69 : vector<8x64xf32>
    %71 = math.tanh %70 : vector<8x64xf32>
    %cst_64 = arith.constant 1.000000e+00 : f32
    %72 = vector.broadcast %cst_64 : f32 to vector<8x64xf32>
    %73 = arith.subf %72, %68 : vector<8x64xf32>
    %74 = arith.mulf %73, %71 : vector<8x64xf32>
    %75 = arith.mulf %68, %14 : vector<8x64xf32>
    %76 = arith.addf %74, %75 : vector<8x64xf32>
    %c0_65 = arith.constant 0 : index
    %c0_66 = arith.constant 0 : index
    %c0_67 = arith.constant 0 : index
    %77 = vector.load %arg9[%c0_65, %c0_66, %c0_67] : memref<2x8x64xf32, #tpu.memory_space<vmem>>, vector<1x8x64xf32>
    %78 = vector.shape_cast %77 : vector<1x8x64xf32> to vector<8x64xf32>
    %79 = vector.shape_cast %76 : vector<8x64xf32> to vector<1x8x64xf32>
    tpu.vector_store %arg9[%c0_65, %c0_66, %c0_67], %79 {strides = array<i32>} : memref<2x8x64xf32, #tpu.memory_space<vmem>>, vector<1x8x64xf32>,
    %c1_68 = arith.constant 1 : index
    %c0_69 = arith.constant 0 : index
    %c0_70 = arith.constant 0 : index
    %80 = vector.load %arg9[%c1_68, %c0_69, %c0_70] : memref<2x8x64xf32, #tpu.memory_space<vmem>>, vector<1x8x64xf32>
    %81 = vector.shape_cast %80 : vector<1x8x64xf32> to vector<8x64xf32>
    %c1_71 = arith.constant 1 : index
    %c0_72 = arith.constant 0 : index
    %c0_73 = arith.constant 0 : index
    %c0_74 = arith.constant 0 : index
    %82 = vector.load %arg3[%c1_71, %c0_72, %c0_73, %c0_74] : memref<2x3x32x64xf32, #tpu.memory_space<vmem>>, vector<1x1x32x64xf32>
    %83 = vector.shape_cast %82 : vector<1x1x32x64xf32> to vector<32x64xf32>
    %cst_75 = arith.constant dense<0.000000e+00> : vector<8x64xf32>
    %84 = tpu.matmul %12, %83, %cst_75 {dimension_numbers = #tpu.dot_dimension_numbers<[1], [0], [0], [1], [0, 0, 1, 1], [], []>} : vector<8x32xf32>, vector<32x64xf32>, vector<8x64xf32> -> vector<8x64xf32>
    %c1_76 = arith.constant 1 : index
    %c0_77 = arith.constant 0 : index
    %c0_78 = arith.constant 0 : index
    %c0_79 = arith.constant 0 : index
    %85 = vector.load %arg5[%c1_76, %c0_77, %c0_78, %c0_79] : memref<2x3x1x64xf32, #tpu.memory_space<vmem>>, vector<1x1x1x64xf32>
    %86 = vector.shape_cast %85 : vector<1x1x1x64xf32> to vector<1x64xf32>
    %87 = vector.broadcast %86 : vector<1x64xf32> to vector<8x64xf32>
    %88 = arith.addf %84, %87 : vector<8x64xf32>
    %c1_80 = arith.constant 1 : index
    %c1_81 = arith.constant 1 : index
    %c0_82 = arith.constant 0 : index
    %c0_83 = arith.constant 0 : index
    %89 = vector.load %arg3[%c1_80, %c1_81, %c0_82, %c0_83] : memref<2x3x32x64xf32, #tpu.memory_space<vmem>>, vector<1x1x32x64xf32>
    %90 = vector.shape_cast %89 : vector<1x1x32x64xf32> to vector<32x64xf32>
    %cst_84 = arith.constant dense<0.000000e+00> : vector<8x64xf32>
    %91 = tpu.matmul %12, %90, %cst_84 {dimension_numbers = #tpu.dot_dimension_numbers<[1], [0], [0], [1], [0, 0, 1, 1], [], []>} : vector<8x32xf32>, vector<32x64xf32>, vector<8x64xf32> -> vector<8x64xf32>
    %c1_85 = arith.constant 1 : index
    %c1_86 = arith.constant 1 : index
    %c0_87 = arith.constant 0 : index
    %c0_88 = arith.constant 0 : index
    %92 = vector.load %arg5[%c1_85, %c1_86, %c0_87, %c0_88] : memref<2x3x1x64xf32, #tpu.memory_space<vmem>>, vector<1x1x1x64xf32>
    %93 = vector.shape_cast %92 : vector<1x1x1x64xf32> to vector<1x64xf32>
    %94 = vector.broadcast %93 : vector<1x64xf32> to vector<8x64xf32>
    %95 = arith.addf %91, %94 : vector<8x64xf32>
    %c1_89 = arith.constant 1 : index
    %c2_90 = arith.constant 2 : index
    %c0_91 = arith.constant 0 : index
    %c0_92 = arith.constant 0 : index
    %96 = vector.load %arg3[%c1_89, %c2_90, %c0_91, %c0_92] : memref<2x3x32x64xf32, #tpu.memory_space<vmem>>, vector<1x1x32x64xf32>
    %97 = vector.shape_cast %96 : vector<1x1x32x64xf32> to vector<32x64xf32>
    %cst_93 = arith.constant dense<0.000000e+00> : vector<8x64xf32>
    %98 = tpu.matmul %12, %97, %cst_93 {dimension_numbers = #tpu.dot_dimension_numbers<[1], [0], [0], [1], [0, 0, 1, 1], [], []>} : vector<8x32xf32>, vector<32x64xf32>, vector<8x64xf32> -> vector<8x64xf32>
    %c1_94 = arith.constant 1 : index
    %c2_95 = arith.constant 2 : index
    %c0_96 = arith.constant 0 : index
    %c0_97 = arith.constant 0 : index
    %99 = vector.load %arg5[%c1_94, %c2_95, %c0_96, %c0_97] : memref<2x3x1x64xf32, #tpu.memory_space<vmem>>, vector<1x1x1x64xf32>
    %100 = vector.shape_cast %99 : vector<1x1x1x64xf32> to vector<1x64xf32>
    %101 = vector.broadcast %100 : vector<1x64xf32> to vector<8x64xf32>
    %102 = arith.addf %98, %101 : vector<8x64xf32>
    %c1_98 = arith.constant 1 : index
    %c0_99 = arith.constant 0 : index
    %c0_100 = arith.constant 0 : index
    %c0_101 = arith.constant 0 : index
    %103 = vector.load %arg4[%c1_98, %c0_99, %c0_100, %c0_101] : memref<2x3x64x64xf32, #tpu.memory_space<vmem>>, vector<1x1x64x64xf32>
    %104 = vector.shape_cast %103 : vector<1x1x64x64xf32> to vector<64x64xf32>
    %cst_102 = arith.constant dense<0.000000e+00> : vector<8x64xf32>
    %105 = tpu.matmul %81, %104, %cst_102 {dimension_numbers = #tpu.dot_dimension_numbers<[1], [0], [0], [1], [0, 0, 1, 1], [], []>} : vector<8x64xf32>, vector<64x64xf32>, vector<8x64xf32> -> vector<8x64xf32>
    %c1_103 = arith.constant 1 : index
    %c0_104 = arith.constant 0 : index
    %c0_105 = arith.constant 0 : index
    %c0_106 = arith.constant 0 : index
    %106 = vector.load %arg6[%c1_103, %c0_104, %c0_105, %c0_106] : memref<2x3x1x64xf32, #tpu.memory_space<vmem>>, vector<1x1x1x64xf32>
    %107 = vector.shape_cast %106 : vector<1x1x1x64xf32> to vector<1x64xf32>
    %108 = vector.broadcast %107 : vector<1x64xf32> to vector<8x64xf32>
    %109 = arith.addf %105, %108 : vector<8x64xf32>
    %c1_107 = arith.constant 1 : index
    %c1_108 = arith.constant 1 : index
    %c0_109 = arith.constant 0 : index
    %c0_110 = arith.constant 0 : index
    %110 = vector.load %arg4[%c1_107, %c1_108, %c0_109, %c0_110] : memref<2x3x64x64xf32, #tpu.memory_space<vmem>>, vector<1x1x64x64xf32>
    %111 = vector.shape_cast %110 : vector<1x1x64x64xf32> to vector<64x64xf32>
    %cst_111 = arith.constant dense<0.000000e+00> : vector<8x64xf32>
    %112 = tpu.matmul %81, %111, %cst_111 {dimension_numbers = #tpu.dot_dimension_numbers<[1], [0], [0], [1], [0, 0, 1, 1], [], []>} : vector<8x64xf32>, vector<64x64xf32>, vector<8x64xf32> -> vector<8x64xf32>
    %c1_112 = arith.constant 1 : index
    %c1_113 = arith.constant 1 : index
    %c0_114 = arith.constant 0 : index
    %c0_115 = arith.constant 0 : index
    %113 = vector.load %arg6[%c1_112, %c1_113, %c0_114, %c0_115] : memref<2x3x1x64xf32, #tpu.memory_space<vmem>>, vector<1x1x1x64xf32>
    %114 = vector.shape_cast %113 : vector<1x1x1x64xf32> to vector<1x64xf32>
    %115 = vector.broadcast %114 : vector<1x64xf32> to vector<8x64xf32>
    %116 = arith.addf %112, %115 : vector<8x64xf32>
    %c1_116 = arith.constant 1 : index
    %c2_117 = arith.constant 2 : index
    %c0_118 = arith.constant 0 : index
    %c0_119 = arith.constant 0 : index
    %117 = vector.load %arg4[%c1_116, %c2_117, %c0_118, %c0_119] : memref<2x3x64x64xf32, #tpu.memory_space<vmem>>, vector<1x1x64x64xf32>
    %118 = vector.shape_cast %117 : vector<1x1x64x64xf32> to vector<64x64xf32>
    %cst_120 = arith.constant dense<0.000000e+00> : vector<8x64xf32>
    %119 = tpu.matmul %81, %118, %cst_120 {dimension_numbers = #tpu.dot_dimension_numbers<[1], [0], [0], [1], [0, 0, 1, 1], [], []>} : vector<8x64xf32>, vector<64x64xf32>, vector<8x64xf32> -> vector<8x64xf32>
    %c1_121 = arith.constant 1 : index
    %c2_122 = arith.constant 2 : index
    %c0_123 = arith.constant 0 : index
    %c0_124 = arith.constant 0 : index
    %120 = vector.load %arg6[%c1_121, %c2_122, %c0_123, %c0_124] : memref<2x3x1x64xf32, #tpu.memory_space<vmem>>, vector<1x1x1x64xf32>
    %121 = vector.shape_cast %120 : vector<1x1x1x64xf32> to vector<1x64xf32>
    %122 = vector.broadcast %121 : vector<1x64xf32> to vector<8x64xf32>
    %123 = arith.addf %119, %122 : vector<8x64xf32>
    %124 = arith.addf %88, %109 : vector<8x64xf32>
    %125 = arith.negf %124 : vector<8x64xf32>
    %126 = math.exp %125 : vector<8x64xf32>
    %cst_125 = arith.constant 1.000000e+00 : f32
    %127 = vector.broadcast %cst_125 : f32 to vector<8x64xf32>
    %128 = arith.addf %127, %126 : vector<8x64xf32>
    %129 = arith.divf %127, %128 : vector<8x64xf32>
    %130 = arith.addf %95, %116 : vector<8x64xf32>
    %131 = arith.negf %130 : vector<8x64xf32>
    %132 = math.exp %131 : vector<8x64xf32>
    %cst_126 = arith.constant 1.000000e+00 : f32
    %133 = vector.broadcast %cst_126 : f32 to vector<8x64xf32>
    %134 = arith.addf %133, %132 : vector<8x64xf32>
    %135 = arith.divf %133, %134 : vector<8x64xf32>
    %136 = arith.mulf %129, %123 : vector<8x64xf32>
    %137 = arith.addf %102, %136 : vector<8x64xf32>
    %138 = math.tanh %137 : vector<8x64xf32>
    %cst_127 = arith.constant 1.000000e+00 : f32
    %139 = vector.broadcast %cst_127 : f32 to vector<8x64xf32>
    %140 = arith.subf %139, %135 : vector<8x64xf32>
    %141 = arith.mulf %140, %138 : vector<8x64xf32>
    %142 = arith.mulf %135, %81 : vector<8x64xf32>
    %143 = arith.addf %141, %142 : vector<8x64xf32>
    %c1_128 = arith.constant 1 : index
    %c0_129 = arith.constant 0 : index
    %c0_130 = arith.constant 0 : index
    %144 = vector.load %arg9[%c1_128, %c0_129, %c0_130] : memref<2x8x64xf32, #tpu.memory_space<vmem>>, vector<1x8x64xf32>
    %145 = vector.shape_cast %144 : vector<1x8x64xf32> to vector<8x64xf32>
    %146 = vector.shape_cast %143 : vector<8x64xf32> to vector<1x8x64xf32>
    tpu.vector_store %arg9[%c1_128, %c0_129, %c0_130], %146 {strides = array<i32>} : memref<2x8x64xf32, #tpu.memory_space<vmem>>, vector<1x8x64xf32>,
    %147 = tpu.concatenate %76, %143 in 1 : vector<8x64xf32>, vector<8x64xf32> -> vector<8x128xf32>
    %c0_131 = arith.constant 0 : index
    %c0_132 = arith.constant 0 : index
    %c0_133 = arith.constant 0 : index
    %148 = vector.load %arg8[%c0_131, %c0_132, %c0_133] : memref<1x8x128xf32, #tpu.memory_space<vmem>>, vector<1x8x128xf32>
    %149 = vector.shape_cast %148 : vector<1x8x128xf32> to vector<8x128xf32>
    %150 = vector.shape_cast %147 : vector<8x128xf32> to vector<1x8x128xf32>
    tpu.vector_store %arg8[%c0_131, %c0_132, %c0_133], %150 {strides = array<i32>} : memref<1x8x128xf32, #tpu.memory_space<vmem>>, vector<1x8x128xf32>,
    return
  }
  func.func @transform_0(%arg0: i32) -> (i32, i32, i32) {
    %c0_i32 = arith.constant 0 : i32
    %c0_i32_0 = arith.constant 0 : i32
    %c0_i32_1 = arith.constant 0 : i32
    return %arg0, %c0_i32, %c0_i32_0 : i32, i32, i32
  }
  func.func @transform_1(%arg0: i32) -> (i32, i32) {
    %c0_i32 = arith.constant 0 : i32
    %c0_i32_0 = arith.constant 0 : i32
    %c0_i32_1 = arith.constant 0 : i32
    return %c0_i32, %c0_i32_0 : i32, i32
  }
  func.func @transform_2(%arg0: i32) -> (i32, i32, i32, i32) {
    %c0_i32 = arith.constant 0 : i32
    %c0_i32_0 = arith.constant 0 : i32
    %c0_i32_1 = arith.constant 0 : i32
    %c0_i32_2 = arith.constant 0 : i32
    %c0_i32_3 = arith.constant 0 : i32
    return %c0_i32, %c0_i32_0, %c0_i32_1, %c0_i32_2 : i32, i32, i32, i32
  }
  func.func @transform_3(%arg0: i32) -> (i32, i32, i32, i32) {
    %c0_i32 = arith.constant 0 : i32
    %c0_i32_0 = arith.constant 0 : i32
    %c0_i32_1 = arith.constant 0 : i32
    %c0_i32_2 = arith.constant 0 : i32
    %c0_i32_3 = arith.constant 0 : i32
    return %c0_i32, %c0_i32_0, %c0_i32_1, %c0_i32_2 : i32, i32, i32, i32
  }
  func.func @transform_4(%arg0: i32) -> (i32, i32, i32, i32) {
    %c0_i32 = arith.constant 0 : i32
    %c0_i32_0 = arith.constant 0 : i32
    %c0_i32_1 = arith.constant 0 : i32
    %c0_i32_2 = arith.constant 0 : i32
    %c0_i32_3 = arith.constant 0 : i32
    return %c0_i32, %c0_i32_0, %c0_i32_1, %c0_i32_2 : i32, i32, i32, i32
  }
  func.func @transform_5(%arg0: i32) -> (i32, i32, i32, i32) {
    %c0_i32 = arith.constant 0 : i32
    %c0_i32_0 = arith.constant 0 : i32
    %c0_i32_1 = arith.constant 0 : i32
    %c0_i32_2 = arith.constant 0 : i32
    %c0_i32_3 = arith.constant 0 : i32
    return %c0_i32, %c0_i32_0, %c0_i32_1, %c0_i32_2 : i32, i32, i32, i32
  }
  func.func @transform_6(%arg0: i32) -> (i32, i32, i32) {
    %c0_i32 = arith.constant 0 : i32
    %c0_i32_0 = arith.constant 0 : i32
    %c0_i32_1 = arith.constant 0 : i32
    %c0_i32_2 = arith.constant 0 : i32
    return %c0_i32, %c0_i32_0, %c0_i32_1 : i32, i32, i32
  }
  func.func @transform_7(%arg0: i32) -> (i32, i32, i32) {
    %c0_i32 = arith.constant 0 : i32
    %c0_i32_0 = arith.constant 0 : i32
    %c0_i32_1 = arith.constant 0 : i32
    return %arg0, %c0_i32, %c0_i32_0 : i32, i32, i32
  }
  func.func @transform_8(%arg0: i32) -> (i32, i32, i32) {
    %c0_i32 = arith.constant 0 : i32
    %c0_i32_0 = arith.constant 0 : i32
    %c0_i32_1 = arith.constant 0 : i32
    %c0_i32_2 = arith.constant 0 : i32
    return %c0_i32, %c0_i32_0, %c0_i32_1 : i32, i32, i32
  }
}

</mosaic_0001>

<llo_original>
// kernel: tpu_custom_call.1
$region0: #{tpu_custom_call.1}
  #allocation0 [shape = 'u32[]', space=smem, size = 0x4, offset = 0x4, fixed_abs, tag = 'smem constant byte address 0x4 - core index']
  #allocation1 [shape = 'u32[144,128]{1,0:T(1,128)}', space=vmem, size = 0x12000, scoped, tag = 'internal scratch']
  %s0 = inlined_call_operand.vmem [shape: s32[8,8,1], index: 0, kind: input, shape index: {}]
  %s1 = inlined_call_operand.vmem [shape: f32[128,32], index: 1, kind: input, shape index: {}]
  %s2 = inlined_call_operand.vmem [shape: f32[2,3,32,64], index: 2, kind: input, shape index: {}]
  %s3 = inlined_call_operand.hbm [shape: f32[2,3,64,64], index: 3, kind: input, shape index: {}]
  %s4 = inlined_call_operand.vmem [shape: f32[2,3,1,64], index: 4, kind: input, shape index: {}]
  %s5 = inlined_call_operand.vmem [shape: f32[2,3,1,64], index: 5, kind: input, shape index: {}]
  %s6 = inlined_call_operand.vmem [shape: f32[2,8,64], index: 6, kind: input, shape index: {}]
  %s7 = inlined_call_operand.hbm [shape: f32[8,8,128], index: 7, kind: output, shape index: {0}]
  %s8 = inlined_call_operand.hbm [shape: f32[2,8,64], index: 8, kind: output, shape index: {1}]
  %9 = xla_tuple %s7, %s8
  %s10 = sld [smem:[#allocation0]]
  $region77: #{tpu_custom_call.1} parent=0
    _
  %s12 = ssub.s32 1, %s10
  %s13 = scalar_select 0, %s12, %s10
  $region1: #{tpu_custom_call.1} parent=0
    #allocation2 [shape = 'u8[196608]{0}', space=vmem, size = 0x30000, scoped, tag = 'input window, operand 3, single buffered']
    #allocation3 [shape = 's32[2]{0}', space=sflag, size = 0x8, scoped, tag = 'scoped memory for tpu_custom_call.1']
    #allocation4 [shape = 's32[2]{0}', space=sflag, size = 0x8, scoped, tag = 'scoped memory for tpu_custom_call.1']
    #allocation5 [shape = 'u8[8192]{0}', space=vmem, size = 0x2000, scoped, tag = 'output window, operand 0']
    #allocation6 [shape = 'u8[8192]{0}', space=vmem, size = 0x2000, scoped, tag = 'output window, operand 1, single buffered']
    #allocation7 [shape = 's32[1]{0}', space=sflag, size = 0x4, scoped, tag = 'scoped memory for tpu_custom_call.1']
    %14 = vsyncpa [#allocation3], 0
    %15 = vsyncpa [#allocation4], 0
    %s16 = scalar_lea.sflag [#allocation4], 1
    %17 = vsyncpa %s16, 0
    %18 = vsyncpa [#allocation7], 0
    loop: start=0, step=1, limit=10
    $region2: #{tpu_custom_call.1} parent=1 // loop_pre_header
      _
    $region3: #{tpu_custom_call.1} parent=1 // loop_header
      %s20 = sphi 0, %s24
      %p21 = scmp.ge.s32.totalorder %s20, 10
      %s30 = sphi 0, %s32
      %s33 = sphi 0, %s30
      %s34 = sphi 0, %s33
      %s50 = sphi 0, %s34
      %s54 = sphi 0, %s54
      %s56 = sphi 0, %s54
      %s57 = sphi 0, %s56
      %s71 = sphi 0, %s57
      %s75 = sphi 0, %s75
      %s77 = sphi 0, %s75
      %s78 = sphi 0, %s77
      %s92 = sphi 0, %s78
      %s96 = sphi 0, %s96
      %s98 = sphi 0, %s96
      %s99 = sphi 0, %s98
      %s113 = sphi 0, %s99
      %s117 = sphi 0, %s117
      %s119 = sphi 0, %s117
      %s120 = sphi 0, %s119
      %s134 = sphi 0, %s120
      %s138 = sphi 0, %s138
      %s140 = sphi 0, %s138
      %s141 = sphi 0, %s140
      %s155 = sphi 0, %s141
      %s159 = sphi 0, %s159
      %s161 = sphi 0, %s159
      %s162 = sphi 0, %s161
      %s176 = sphi 0, %s162
      %s182 = sphi 0, %s184
      %s185 = sphi 0, %s182
      %s186 = sphi 0, %s185
      %s202 = sphi 0, %s186
      %s206 = sphi 0, %s206
      %s208 = sphi 0, %s206
      %s209 = sphi 0, %s208
      %s223 = sphi 0, %s209
    $region4: #{tpu_custom_call.1} parent=1 // loop_header_branch
      %23 = sbr.rel (%p21) target = $region8
    $region5: #{tpu_custom_call.1} parent=1 // loop_body
      %s25 = ssub.s32 %s20, 1
      %s26 = ssub.s32 %s20, 2
      %s27 = sadd.s32 %s20, 1
      %s28 = ssub.s32 %s20, %s27
      %p29 = scmp.eq.s32.totalorder %s28, 0
      %s31 = sadd.s32 %s30, 1
      %s32 = scalar_select %p29, %s30, %s31
      %p35 = pneg %p29
      %p36 = scmp.eq.s32.totalorder %s20, 7
      %p37 = por %p35, %p36
      %p38 = scmp.ne.s32.totalorder %s30, %s33
      %p39 = scmp.eq.s32.totalorder %s20, 0
      %p40 = por %p38, %p39
      %p41 = scmp.ne.s32.totalorder %s30, %s33
      %p42 = scmp.eq.s32.totalorder %s25, 7
      %p43 = por %p41, %p42
      %p44 = scmp.ne.s32.totalorder %s33, %s34
      %p45 = scmp.eq.s32.totalorder %s25, 0
      %p46 = por %p44, %p45
      %p47 = scmp.ne.s32.totalorder %s33, %s34
      %p48 = scmp.eq.s32.totalorder %s26, 7
      %p49 = por %p47, %p48
      %p51 = scmp.ne.s32.totalorder %s34, %s50
      %p52 = scmp.eq.s32.totalorder %s26, 0
      %p53 = por %p51, %p52
      %s55 = sadd.s32 %s54, 1
      %p58 = scmp.eq.s32.totalorder %s20, 7
      %p59 = scmp.ne.s32.totalorder %s54, %s56
      %p60 = scmp.eq.s32.totalorder %s20, 0
      %p61 = por %p59, %p60
      %p62 = scmp.ne.s32.totalorder %s54, %s56
      %p63 = scmp.eq.s32.totalorder %s25, 7
      %p64 = por %p62, %p63
      %p65 = scmp.ne.s32.totalorder %s56, %s57
      %p66 = scmp.eq.s32.totalorder %s25, 0
      %p67 = por %p65, %p66
      %p68 = scmp.ne.s32.totalorder %s56, %s57
      %p69 = scmp.eq.s32.totalorder %s26, 7
      %p70 = por %p68, %p69
      %p72 = scmp.ne.s32.totalorder %s57, %s71
      %p73 = scmp.eq.s32.totalorder %s26, 0
      %p74 = por %p72, %p73
      %s76 = sadd.s32 %s75, 1
      %p79 = scmp.eq.s32.totalorder %s20, 7
      %p80 = scmp.ne.s32.totalorder %s75, %s77
      %p81 = scmp.eq.s32.totalorder %s20, 0
      %p82 = por %p80, %p81
      %p83 = scmp.ne.s32.totalorder %s75, %s77
      %p84 = scmp.eq.s32.totalorder %s25, 7
      %p85 = por %p83, %p84
      %p86 = scmp.ne.s32.totalorder %s77, %s78
      %p87 = scmp.eq.s32.totalorder %s25, 0
      %p88 = por %p86, %p87
      %p89 = scmp.ne.s32.totalorder %s77, %s78
      %p90 = scmp.eq.s32.totalorder %s26, 7
      %p91 = por %p89, %p90
      %p93 = scmp.ne.s32.totalorder %s78, %s92
      %p94 = scmp.eq.s32.totalorder %s26, 0
      %p95 = por %p93, %p94
      %s97 = sadd.s32 %s96, 1
      %p100 = scmp.eq.s32.totalorder %s20, 7
      %p101 = scmp.ne.s32.totalorder %s96, %s98
      %p102 = scmp.eq.s32.totalorder %s20, 0
      %p103 = por %p101, %p102
      %p104 = scmp.ne.s32.totalorder %s96, %s98
      %p105 = scmp.eq.s32.totalorder %s25, 7
      %p106 = por %p104, %p105
      %p107 = scmp.ne.s32.totalorder %s98, %s99
      %p108 = scmp.eq.s32.totalorder %s25, 0
      %p109 = por %p107, %p108
      %p110 = scmp.ne.s32.totalorder %s98, %s99
      %p111 = scmp.eq.s32.totalorder %s26, 7
      %p112 = por %p110, %p111
      %p114 = scmp.ne.s32.totalorder %s99, %s113
      %p115 = scmp.eq.s32.totalorder %s26, 0
      %p116 = por %p114, %p115
      %s118 = sadd.s32 %s117, 1
      %p121 = scmp.eq.s32.totalorder %s20, 7
      %p122 = scmp.ne.s32.totalorder %s117, %s119
      %p123 = scmp.eq.s32.totalorder %s20, 0
      %p124 = por %p122, %p123
      %p125 = scmp.ne.s32.totalorder %s117, %s119
      %p126 = scmp.eq.s32.totalorder %s25, 7
      %p127 = por %p125, %p126
      %p128 = scmp.ne.s32.totalorder %s119, %s120
      %p129 = scmp.eq.s32.totalorder %s25, 0
      %p130 = por %p128, %p129
      %p131 = scmp.ne.s32.totalorder %s119, %s120
      %p132 = scmp.eq.s32.totalorder %s26, 7
      %p133 = por %p131, %p132
      %p135 = scmp.ne.s32.totalorder %s120, %s134
      %p136 = scmp.eq.s32.totalorder %s26, 0
      %p137 = por %p135, %p136
      %s139 = sadd.s32 %s138, 1
      %p142 = scmp.eq.s32.totalorder %s20, 7
      %p143 = scmp.ne.s32.totalorder %s138, %s140
      %p144 = scmp.eq.s32.totalorder %s20, 0
      %p145 = por %p143, %p144
      %p146 = scmp.ne.s32.totalorder %s138, %s140
      %p147 = scmp.eq.s32.totalorder %s25, 7
      %p148 = por %p146, %p147
      %p149 = scmp.ne.s32.totalorder %s140, %s141
      %p150 = scmp.eq.s32.totalorder %s25, 0
      %p151 = por %p149, %p150
      %p152 = scmp.ne.s32.totalorder %s140, %s141
      %p153 = scmp.eq.s32.totalorder %s26, 7
      %p154 = por %p152, %p153
      %p156 = scmp.ne.s32.totalorder %s141, %s155
      %p157 = scmp.eq.s32.totalorder %s26, 0
      %p158 = por %p156, %p157
      %s160 = sadd.s32 %s159, 1
      %p163 = scmp.eq.s32.totalorder %s20, 7
      %p164 = scmp.ne.s32.totalorder %s159, %s161
      %p165 = scmp.eq.s32.totalorder %s20, 0
      %p166 = por %p164, %p165
      %p167 = scmp.ne.s32.totalorder %s159, %s161
      %p168 = scmp.eq.s32.totalorder %s25, 7
      %p169 = por %p167, %p168
      %p170 = scmp.ne.s32.totalorder %s161, %s162
      %p171 = scmp.eq.s32.totalorder %s25, 0
      %p172 = por %p170, %p171
      %p173 = scmp.ne.s32.totalorder %s161, %s162
      %p174 = scmp.eq.s32.totalorder %s26, 7
      %p175 = por %p173, %p174
      %p177 = scmp.ne.s32.totalorder %s162, %s176
      %p178 = scmp.eq.s32.totalorder %s26, 0
      %p179 = por %p177, %p178
      %s180 = ssub.s32 %s20, %s27
      %p181 = scmp.eq.s32.totalorder %s180, 0
      %s183 = sadd.s32 %s182, 1
      %s184 = scalar_select %p181, %s182, %s183
      %p187 = pneg %p181
      %p188 = scmp.eq.s32.totalorder %s20, 7
      %p189 = por %p187, %p188
      %p190 = scmp.ne.s32.totalorder %s182, %s185
      %p191 = scmp.eq.s32.totalorder %s20, 0
      %p192 = por %p190, %p191
      %p193 = scmp.ne.s32.totalorder %s182, %s185
      %p194 = scmp.eq.s32.totalorder %s25, 7
      %p195 = por %p193, %p194
      %p196 = scmp.ne.s32.totalorder %s185, %s186
      %p197 = scmp.eq.s32.totalorder %s25, 0
      %p198 = por %p196, %p197
      %p199 = scmp.ne.s32.totalorder %s185, %s186
      %p200 = scmp.eq.s32.totalorder %s26, 7
      %p201 = por %p199, %p200
      %p203 = scmp.ne.s32.totalorder %s186, %s202
      %p204 = scmp.eq.s32.totalorder %s26, 0
      %p205 = por %p203, %p204
      %s207 = sadd.s32 %s206, 1
      %p210 = scmp.eq.s32.totalorder %s20, 7
      %p211 = scmp.ne.s32.totalorder %s206, %s208
      %p212 = scmp.eq.s32.totalorder %s20, 0
      %p213 = por %p211, %p212
      %p214 = scmp.ne.s32.totalorder %s206, %s208
      %p215 = scmp.eq.s32.totalorder %s25, 7
      %p216 = por %p214, %p215
      %p217 = scmp.ne.s32.totalorder %s208, %s209
      %p218 = scmp.eq.s32.totalorder %s25, 0
      %p219 = por %p217, %p218
      %p220 = scmp.ne.s32.totalorder %s208, %s209
      %p221 = scmp.eq.s32.totalorder %s26, 7
      %p222 = por %p220, %p221
      %p224 = scmp.ne.s32.totalorder %s209, %s223
      %p225 = scmp.eq.s32.totalorder %s26, 0
      %p226 = por %p224, %p225
      %p227 = scmp.le.s32.totalorder 1, %s20
      %p228 = scmp.lt.s32.totalorder %s20, 9
      %p229 = pnand %p227, %p228
      %p230 = pneg %p229
      // Predicated region
      $region9: #{tpu_custom_call.1} parent=5 // pred_check
        _
      $region10: #{tpu_custom_call.1} parent=5 // pred_check_branch
        %232 = sbr.rel (%p229) target = $region12
      $region11: #{tpu_custom_call.1} parent=5 // pred_region
        %s233 = ssub.s32 %s20, 1
        // Predicated region
        $region13: #{tpu_custom_call.1} parent=11 // pred_check
          %p234 = pneg %p67
        $region14: #{tpu_custom_call.1} parent=11 // pred_check_branch
          %236 = sbr.rel (%p234) target = $region16
        $region15: #{tpu_custom_call.1} parent=11 // pred_region
          _
        $region16: #{tpu_custom_call.1} parent=11 // pred_fallthru
          _
        // Predicated region
        $region17: #{tpu_custom_call.1} parent=11 // pred_check
          %p237 = pneg %p88
        $region18: #{tpu_custom_call.1} parent=11 // pred_check_branch
          %239 = sbr.rel (%p237) target = $region20
        $region19: #{tpu_custom_call.1} parent=11 // pred_region
          _
        $region20: #{tpu_custom_call.1} parent=11 // pred_fallthru
          _
        // Predicated region
        $region21: #{tpu_custom_call.1} parent=11 // pred_check
          %p240 = pneg %p109
        $region22: #{tpu_custom_call.1} parent=11 // pred_check_branch
          %242 = sbr.rel (%p240) target = $region24
        $region23: #{tpu_custom_call.1} parent=11 // pred_region
          %s244 = ssub.s32 6144, 6144
          %245 = vsyncadd [#allocation3], %s244
          %s246 = sshll.u32 [#allocation2], 4
          %s247 = int_to_ptr.vmem [resolvable:$true] %s246
          %252 = dma.hbm_to_vmem [thread:$0]  %s3, 6144, %s247, [#allocation3], 128, 128, 8
        $region24: #{tpu_custom_call.1} parent=11 // pred_fallthru
          _
        // Predicated region
        $region25: #{tpu_custom_call.1} parent=11 // pred_check
          %p253 = pneg %p130
        $region26: #{tpu_custom_call.1} parent=11 // pred_check_branch
          %255 = sbr.rel (%p253) target = $region28
        $region27: #{tpu_custom_call.1} parent=11 // pred_region
          _
        $region28: #{tpu_custom_call.1} parent=11 // pred_fallthru
          _
        // Predicated region
        $region29: #{tpu_custom_call.1} parent=11 // pred_check
          %p256 = pneg %p151
        $region30: #{tpu_custom_call.1} parent=11 // pred_check_branch
          %258 = sbr.rel (%p256) target = $region32
        $region31: #{tpu_custom_call.1} parent=11 // pred_region
          _
        $region32: #{tpu_custom_call.1} parent=11 // pred_fallthru
          _
        // Predicated region
        $region33: #{tpu_custom_call.1} parent=11 // pred_check
          %p259 = pneg %p172
        $region34: #{tpu_custom_call.1} parent=11 // pred_check_branch
          %261 = sbr.rel (%p259) target = $region36
        $region35: #{tpu_custom_call.1} parent=11 // pred_region
          _
        $region36: #{tpu_custom_call.1} parent=11 // pred_fallthru
          _
      $region12: #{tpu_custom_call.1} parent=5 // pred_fallthru
        _
      %p262 = scmp.lt.s32.totalorder %s20, 8
      // Predicated region
      $region37: #{tpu_custom_call.1} parent=5 // pred_check
        %p263 = pneg %p262
      $region38: #{tpu_custom_call.1} parent=5 // pred_check_branch
        %265 = sbr.rel (%p263) target = $region40
      $region39: #{tpu_custom_call.1} parent=5 // pred_region
        // Predicated region
        $region41: #{tpu_custom_call.1} parent=39 // pred_check
          %p266 = pneg %p40
        $region42: #{tpu_custom_call.1} parent=39 // pred_check_branch
          %268 = sbr.rel (%p266) target = $region44
        $region43: #{tpu_custom_call.1} parent=39 // pred_region
          %p269 = scmp.lt.s32.totalorder %s20, 7
          %s270 = scalar_select %p269, %s20, 7
          %s271 = smul.addr %s270, 8
          %s272 = scalar_lea.vmem %s0, %s271
        $region44: #{tpu_custom_call.1} parent=39 // pred_fallthru
          _
      $region40: #{tpu_custom_call.1} parent=5 // pred_fallthru
        _
      %p273 = scmp.le.s32.totalorder 1, %s20
      %p274 = scmp.lt.s32.totalorder %s20, 9
      %p275 = pnand %p273, %p274
      %p276 = pneg %p275
      // Predicated region
      $region45: #{tpu_custom_call.1} parent=5 // pred_check
        _
      $region46: #{tpu_custom_call.1} parent=5 // pred_check_branch
        %278 = sbr.rel (%p275) target = $region48
      $region47: #{tpu_custom_call.1} parent=5 // pred_region
        %s279 = ssub.s32 %s20, 1
        // Predicated region
        $region49: #{tpu_custom_call.1} parent=47 // pred_check
          %p280 = pneg %p109
        $region50: #{tpu_custom_call.1} parent=47 // pred_check_branch
          %282 = sbr.rel (%p280) target = $region52
        $region51: #{tpu_custom_call.1} parent=47 // pred_region
          %283 = dma.done [#allocation3], 6144
        $region52: #{tpu_custom_call.1} parent=47 // pred_fallthru
          _
        %p284 = scmp.lt.s32.totalorder %s25, 7
        %s285 = scalar_select %p284, %s25, 7
        %s286 = smul.addr %s285, 8
        %s287 = scalar_lea.vmem %s0, %s286
        %p288 = pneg %p46
        %p289 = pneg %p43
        %p290 = pneg %p67
        %p291 = pneg %p64
        %p292 = pneg %p88
        %p293 = pneg %p85
        %p294 = pneg %p109
        %p295 = pneg %p106
        %p296 = pneg %p130
        %p297 = pneg %p127
        %p298 = pneg %p151
        %p299 = pneg %p148
        %p300 = pneg %p172
        %p301 = pneg %p169
        %p302 = pneg %p198
        %p303 = pneg %p195
        %s304 = sand.u32 %s185, 1
        %s305 = scalar_lea.sflag [#allocation4], %s304
        %s306 = sand.u32 %s185, 1
        %s307 = smul.addr %s306, 8
        %s308 = scalar_lea.vmem [#allocation5], %s307
        %p309 = pneg %p219
        %p310 = pneg %p216
        %p311 = scmp.lt.s32.totalorder %s25, 7
        %s312 = scalar_select %p311, %s25, 7
        %s313 = smul.addr %s312, 8
        %s314 = scalar_lea.vmem %s0, %s313
        %p315 = scmp.eq.s32.totalorder %s25, 0
        // Predicated region
        $region53: #{tpu_custom_call.1} parent=47 // pred_check
          %p316 = pneg %p315
        $region54: #{tpu_custom_call.1} parent=47 // pred_check_branch
          %318 = sbr.rel (%p316) target = $region56
        $region55: #{tpu_custom_call.1} parent=47 // pred_region
          %v319 = vld [vmem:[%s6] sm:$0xff]
          %v320 = vld [vmem:[%s6 + $0x8] sm:$0xff]
          %vm321 = vcmask 523264
          %322 = vst.msk [vmem:[#allocation6] sm:$0xff] %vm321, %v319
          %323 = vst.msk [vmem:[#allocation6 + $0x8] sm:$0xff] %vm321, %v320
        $region56: #{tpu_custom_call.1} parent=47 // pred_fallthru
          _
        %v324 = vld [vmem:[%s314] sm:$0xff]
        %v325 = vlaneseq
        %v326 = vand.u32 %v325, 127
        %327 = vset.pattern.permute.xlu0 0
        %328 = vperm.xlu0 %327, %v324
        %v329 = vpop.permute.xlu0 %328
        %vm330 = vcmp.eq.s32.totalorder %v326, %v329
        %v331 = vsel %vm330, 1.0, 0.0
        %v332 = vld [vmem:[%s1] sm:$0xff]
        %v333 = vld [vmem:[%s1 + $0x8] sm:$0xff]
        %v334 = vld [vmem:[%s1 + $0x10] sm:$0xff]
        %v335 = vld [vmem:[%s1 + $0x18] sm:$0xff]
        %v336 = vld [vmem:[%s1 + $0x20] sm:$0xff]
        %v337 = vld [vmem:[%s1 + $0x28] sm:$0xff]
        %v338 = vld [vmem:[%s1 + $0x30] sm:$0xff]
        %v339 = vld [vmem:[%s1 + $0x38] sm:$0xff]
        %v340 = vld [vmem:[%s1 + $0x40] sm:$0xff]
        %v341 = vld [vmem:[%s1 + $0x48] sm:$0xff]
        %v342 = vld [vmem:[%s1 + $0x50] sm:$0xff]
        %v343 = vld [vmem:[%s1 + $0x58] sm:$0xff]
        %v344 = vld [vmem:[%s1 + $0x60] sm:$0xff]
        %v345 = vld [vmem:[%s1 + $0x68] sm:$0xff]
        %v346 = vld [vmem:[%s1 + $0x70] sm:$0xff]
        %v347 = vld [vmem:[%s1 + $0x78] sm:$0xff]
        %348 = vmatprep.subr.mxu0 0.0
        %349 = vmatpush1.msra.mxu0 %v347
        %350 = vmatprep.subr.mxu0 0.0
        %351 = vmatpush1.msra.mxu0 %v346
        %352 = vmatprep.subr.mxu0 0.0
        %353 = vmatpush1.msra.mxu0 %v345
        %354 = vmatprep.subr.mxu0 0.0
        %355 = vmatpush1.msra.mxu0 %v344
        %356 = vmatprep.subr.mxu0 0.0
        %357 = vmatpush1.msra.mxu0 %v343
        %358 = vmatprep.subr.mxu0 0.0
        %359 = vmatpush1.msra.mxu0 %v342
        %360 = vmatprep.subr.mxu0 0.0
        %361 = vmatpush1.msra.mxu0 %v341
        %362 = vmatprep.subr.mxu0 0.0
        %363 = vmatpush1.msra.mxu0 %v340
        %364 = vmatprep.subr.mxu0 0.0
        %365 = vmatpush1.msra.mxu0 %v339
        %366 = vmatprep.subr.mxu0 0.0
        %367 = vmatpush1.msra.mxu0 %v338
        %368 = vmatprep.subr.mxu0 0.0
        %369 = vmatpush1.msra.mxu0 %v337
        %370 = vmatprep.subr.mxu0 0.0
        %371 = vmatpush1.msra.mxu0 %v336
        %372 = vmatprep.subr.mxu0 0.0
        %373 = vmatpush1.msra.mxu0 %v335
        %374 = vmatprep.subr.mxu0 0.0
        %375 = vmatpush1.msra.mxu0 %v334
        %376 = vmatprep.subr.mxu0 0.0
        %377 = vmatpush1.msra.mxu0 %v333
        %378 = vmatprep.subr.mxu0 0.0
        %379 = vmatpush1.msra.mxu0 %v332
        %380 = vmatprep.subr.mxu0 0.0
        %381 = vmatpush2.msra.mxu0 0.0
        %382 = vmatprep.subr.mxu0 0.0
        %383 = vmatpush2.msra.mxu0 0.0
        %384 = vmatprep.subr.mxu0 0.0
        %385 = vmatpush2.msra.mxu0 0.0
        %386 = vmatprep.subr.mxu0 0.0
        %387 = vmatpush2.msra.mxu0 0.0
        %388 = vmatprep.subr.mxu0 0.0
        %389 = vmatpush2.msra.mxu0 0.0
        %390 = vmatprep.subr.mxu0 0.0
        %391 = vmatpush2.msra.mxu0 0.0
        %392 = vmatprep.subr.mxu0 0.0
        %393 = vmatpush2.msra.mxu0 0.0
        %394 = vmatprep.subr.mxu0 0.0
        %395 = vmatpush2.msra.mxu0 0.0
        %396 = vmatprep.subr.mxu0 0.0
        %397 = vmatpush2.msra.mxu0 0.0
        %398 = vmatprep.subr.mxu0 0.0
        %399 = vmatpush2.msra.mxu0 0.0
        %400 = vmatprep.subr.mxu0 0.0
        %401 = vmatpush2.msra.mxu0 0.0
        %402 = vmatprep.subr.mxu0 0.0
        %403 = vmatpush2.msra.mxu0 0.0
        %404 = vmatprep.subr.mxu0 0.0
        %405 = vmatpush2.msra.mxu0 0.0
        %406 = vmatprep.subr.mxu0 0.0
        %407 = vmatpush2.msra.mxu0 0.0
        %408 = vmatprep.subr.mxu0 0.0
        %409 = vmatpush2.msra.mxu0 0.0
        %410 = vmatprep.subr.mxu0 0.0
        %411 = vmatpush2.msra.mxu0 0.0
        %412 = vmatprep.mubr.f32.mxu0 0.0
        %413 = vmatmul.mubr.f32.gmra.mxu0 %v331
        %v414 = vpop.f32.mrf.mxu0
        %v415 = vadd.f32 0.0, %v414
        %v416 = vpop.f32.mrf.mxu0
        %417 = vdwg.mxu0
        %v418 = vld [vmem:[#allocation6] sm:$0xff]
        %v419 = vld [vmem:[%s2] sm:$0xff]
        %v420 = vld [vmem:[%s2 + $0x8] sm:$0xff]
        %v421 = vld [vmem:[%s2 + $0x10] sm:$0xff]
        %v422 = vld [vmem:[%s2 + $0x18] sm:$0xff]
        %v423 = vld [vmem:[%s4] sm:$0x1]
        %v425 = vlaneseq
        %v426 = vshrl.u32 %v425, 7
        %v427 = vsub.s32 0, %v426
        %v428 = vrot.slane %v423, %v427
        %vm430 = vcmask 261120
        %v432 = vsel %vm430, %v415, 0
        %434 = vmatprep.subr.mxu0 0.0
        %435 = vmatpush1.msra.mxu0 0.0
        %436 = vmatprep.subr.mxu0 0.0
        %437 = vmatpush1.msra.mxu0 0.0
        %438 = vmatprep.subr.mxu0 0.0
        %439 = vmatpush1.msra.mxu0 0.0
        %440 = vmatprep.subr.mxu0 0.0
        %441 = vmatpush1.msra.mxu0 0.0
        %442 = vmatprep.subr.mxu0 0.0
        %443 = vmatpush1.msra.mxu0 0.0
        %444 = vmatprep.subr.mxu0 0.0
        %445 = vmatpush1.msra.mxu0 0.0
        %446 = vmatprep.subr.mxu0 0.0
        %447 = vmatpush1.msra.mxu0 0.0
        %448 = vmatprep.subr.mxu0 0.0
        %449 = vmatpush1.msra.mxu0 0.0
        %450 = vmatprep.subr.mxu0 0.0
        %451 = vmatpush1.msra.mxu0 0.0
        %452 = vmatprep.subr.mxu0 0.0
        %453 = vmatpush1.msra.mxu0 0.0
        %454 = vmatprep.subr.mxu0 0.0
        %455 = vmatpush1.msra.mxu0 0.0
        %456 = vmatprep.subr.mxu0 0.0
        %457 = vmatpush1.msra.mxu0 0.0
        %458 = vmatprep.subr.mxu0 0.0
        %459 = vmatpush1.msra.mxu0 %v422
        %460 = vmatprep.subr.mxu0 0.0
        %461 = vmatpush1.msra.mxu0 %v421
        %462 = vmatprep.subr.mxu0 0.0
        %463 = vmatpush1.msra.mxu0 %v420
        %464 = vmatprep.subr.mxu0 0.0
        %465 = vmatpush1.msra.mxu0 %v419
        %466 = vmatprep.subr.mxu0 0.0
        %467 = vmatpush2.msra.mxu0 0.0
        %468 = vmatprep.subr.mxu0 0.0
        %469 = vmatpush2.msra.mxu0 0.0
        %470 = vmatprep.subr.mxu0 0.0
        %471 = vmatpush2.msra.mxu0 0.0
        %472 = vmatprep.subr.mxu0 0.0
        %473 = vmatpush2.msra.mxu0 0.0
        %474 = vmatprep.subr.mxu0 0.0
        %475 = vmatpush2.msra.mxu0 0.0
        %476 = vmatprep.subr.mxu0 0.0
        %477 = vmatpush2.msra.mxu0 0.0
        %478 = vmatprep.subr.mxu0 0.0
        %479 = vmatpush2.msra.mxu0 0.0
        %480 = vmatprep.subr.mxu0 0.0
        %481 = vmatpush2.msra.mxu0 0.0
        %482 = vmatprep.subr.mxu0 0.0
        %483 = vmatpush2.msra.mxu0 0.0
        %484 = vmatprep.subr.mxu0 0.0
        %485 = vmatpush2.msra.mxu0 0.0
        %486 = vmatprep.subr.mxu0 0.0
        %487 = vmatpush2.msra.mxu0 0.0
        %488 = vmatprep.subr.mxu0 0.0
        %489 = vmatpush2.msra.mxu0 0.0
        %490 = vmatprep.subr.mxu0 0.0
        %491 = vmatpush2.msra.mxu0 0.0
        %492 = vmatprep.subr.mxu0 0.0
        %493 = vmatpush2.msra.mxu0 0.0
        %494 = vmatprep.subr.mxu0 0.0
        %495 = vmatpush2.msra.mxu0 0.0
        %496 = vmatprep.subr.mxu0 0.0
        %497 = vmatpush2.msra.mxu0 0.0
        %498 = vmatprep.mubr.f32.mxu0 0.0
        %499 = vmatmul.mubr.f32.gmra.mxu0 %v432
        %v500 = vpop.f32.mrf.mxu0
        %v501 = vadd.f32 %v428, %v500
        %v502 = vpop.f32.mrf.mxu0
        %503 = vdwg.mxu0
        %s504 = scalar_lea.vmem %s2, 32
        %v505 = vld [vmem:[%s504] sm:$0xff]
        %v506 = vld [vmem:[%s504 + $0x8] sm:$0xff]
        %v507 = vld [vmem:[%s504 + $0x10] sm:$0xff]
        %v508 = vld [vmem:[%s504 + $0x18] sm:$0xff]
        %s509 = scalar_lea.vmem %s4, 1
        %v510 = vld [vmem:[%s509] sm:$0x1]
        %v512 = vlaneseq
        %v513 = vshrl.u32 %v512, 7
        %v514 = vsub.s32 0, %v513
        %v515 = vrot.slane %v510, %v514
        %517 = vmatprep.subr.mxu0 0.0
        %518 = vmatpush1.msra.mxu0 0.0
        %519 = vmatprep.subr.mxu0 0.0
        %520 = vmatpush1.msra.mxu0 0.0
        %521 = vmatprep.subr.mxu0 0.0
        %522 = vmatpush1.msra.mxu0 0.0
        %523 = vmatprep.subr.mxu0 0.0
        %524 = vmatpush1.msra.mxu0 0.0
        %525 = vmatprep.subr.mxu0 0.0
        %526 = vmatpush1.msra.mxu0 0.0
        %527 = vmatprep.subr.mxu0 0.0
        %528 = vmatpush1.msra.mxu0 0.0
        %529 = vmatprep.subr.mxu0 0.0
        %530 = vmatpush1.msra.mxu0 0.0
        %531 = vmatprep.subr.mxu0 0.0
        %532 = vmatpush1.msra.mxu0 0.0
        %533 = vmatprep.subr.mxu0 0.0
        %534 = vmatpush1.msra.mxu0 0.0
        %535 = vmatprep.subr.mxu0 0.0
        %536 = vmatpush1.msra.mxu0 0.0
        %537 = vmatprep.subr.mxu0 0.0
        %538 = vmatpush1.msra.mxu0 0.0
        %539 = vmatprep.subr.mxu0 0.0
        %540 = vmatpush1.msra.mxu0 0.0
        %541 = vmatprep.subr.mxu0 0.0
        %542 = vmatpush1.msra.mxu0 %v508
        %543 = vmatprep.subr.mxu0 0.0
        %544 = vmatpush1.msra.mxu0 %v507
        %545 = vmatprep.subr.mxu0 0.0
        %546 = vmatpush1.msra.mxu0 %v506
        %547 = vmatprep.subr.mxu0 0.0
        %548 = vmatpush1.msra.mxu0 %v505
        %549 = vmatprep.subr.mxu0 0.0
        %550 = vmatpush2.msra.mxu0 0.0
        %551 = vmatprep.subr.mxu0 0.0
        %552 = vmatpush2.msra.mxu0 0.0
        %553 = vmatprep.subr.mxu0 0.0
        %554 = vmatpush2.msra.mxu0 0.0
        %555 = vmatprep.subr.mxu0 0.0
        %556 = vmatpush2.msra.mxu0 0.0
        %557 = vmatprep.subr.mxu0 0.0
        %558 = vmatpush2.msra.mxu0 0.0
        %559 = vmatprep.subr.mxu0 0.0
        %560 = vmatpush2.msra.mxu0 0.0
        %561 = vmatprep.subr.mxu0 0.0
        %562 = vmatpush2.msra.mxu0 0.0
        %563 = vmatprep.subr.mxu0 0.0
        %564 = vmatpush2.msra.mxu0 0.0
        %565 = vmatprep.subr.mxu0 0.0
        %566 = vmatpush2.msra.mxu0 0.0
        %567 = vmatprep.subr.mxu0 0.0
        %568 = vmatpush2.msra.mxu0 0.0
        %569 = vmatprep.subr.mxu0 0.0
        %570 = vmatpush2.msra.mxu0 0.0
        %571 = vmatprep.subr.mxu0 0.0
        %572 = vmatpush2.msra.mxu0 0.0
        %573 = vmatprep.subr.mxu0 0.0
        %574 = vmatpush2.msra.mxu0 0.0
        %575 = vmatprep.subr.mxu0 0.0
        %576 = vmatpush2.msra.mxu0 0.0
        %577 = vmatprep.subr.mxu0 0.0
        %578 = vmatpush2.msra.mxu0 0.0
        %579 = vmatprep.subr.mxu0 0.0
        %580 = vmatpush2.msra.mxu0 0.0
        %581 = vmatprep.mubr.f32.mxu0 0.0
        %582 = vmatmul.mubr.f32.gmra.mxu0 %v432
        %v583 = vpop.f32.mrf.mxu0
        %v584 = vadd.f32 %v515, %v583
        %v585 = vpop.f32.mrf.mxu0
        %586 = vdwg.mxu0
        %s587 = scalar_lea.vmem %s2, 64
        %v588 = vld [vmem:[%s587] sm:$0xff]
        %v589 = vld [vmem:[%s587 + $0x8] sm:$0xff]
        %v590 = vld [vmem:[%s587 + $0x10] sm:$0xff]
        %v591 = vld [vmem:[%s587 + $0x18] sm:$0xff]
        %s592 = scalar_lea.vmem %s4, 2
        %v593 = vld [vmem:[%s592] sm:$0x1]
        %v595 = vlaneseq
        %v596 = vshrl.u32 %v595, 7
        %v597 = vsub.s32 0, %v596
        %v598 = vrot.slane %v593, %v597
        %600 = vmatprep.subr.mxu0 0.0
        %601 = vmatpush1.msra.mxu0 0.0
        %602 = vmatprep.subr.mxu0 0.0
        %603 = vmatpush1.msra.mxu0 0.0
        %604 = vmatprep.subr.mxu0 0.0
        %605 = vmatpush1.msra.mxu0 0.0
        %606 = vmatprep.subr.mxu0 0.0
        %607 = vmatpush1.msra.mxu0 0.0
        %608 = vmatprep.subr.mxu0 0.0
        %609 = vmatpush1.msra.mxu0 0.0
        %610 = vmatprep.subr.mxu0 0.0
        %611 = vmatpush1.msra.mxu0 0.0
        %612 = vmatprep.subr.mxu0 0.0
        %613 = vmatpush1.msra.mxu0 0.0
        %614 = vmatprep.subr.mxu0 0.0
        %615 = vmatpush1.msra.mxu0 0.0
        %616 = vmatprep.subr.mxu0 0.0
        %617 = vmatpush1.msra.mxu0 0.0
        %618 = vmatprep.subr.mxu0 0.0
        %619 = vmatpush1.msra.mxu0 0.0
        %620 = vmatprep.subr.mxu0 0.0
        %621 = vmatpush1.msra.mxu0 0.0
        %622 = vmatprep.subr.mxu0 0.0
        %623 = vmatpush1.msra.mxu0 0.0
        %624 = vmatprep.subr.mxu0 0.0
        %625 = vmatpush1.msra.mxu0 %v591
        %626 = vmatprep.subr.mxu0 0.0
        %627 = vmatpush1.msra.mxu0 %v590
        %628 = vmatprep.subr.mxu0 0.0
        %629 = vmatpush1.msra.mxu0 %v589
        %630 = vmatprep.subr.mxu0 0.0
        %631 = vmatpush1.msra.mxu0 %v588
        %632 = vmatprep.subr.mxu0 0.0
        %633 = vmatpush2.msra.mxu0 0.0
        %634 = vmatprep.subr.mxu0 0.0
        %635 = vmatpush2.msra.mxu0 0.0
        %636 = vmatprep.subr.mxu0 0.0
        %637 = vmatpush2.msra.mxu0 0.0
        %638 = vmatprep.subr.mxu0 0.0
        %639 = vmatpush2.msra.mxu0 0.0
        %640 = vmatprep.subr.mxu0 0.0
        %641 = vmatpush2.msra.mxu0 0.0
        %642 = vmatprep.subr.mxu0 0.0
        %643 = vmatpush2.msra.mxu0 0.0
        %644 = vmatprep.subr.mxu0 0.0
        %645 = vmatpush2.msra.mxu0 0.0
        %646 = vmatprep.subr.mxu0 0.0
        %647 = vmatpush2.msra.mxu0 0.0
        %648 = vmatprep.subr.mxu0 0.0
        %649 = vmatpush2.msra.mxu0 0.0
        %650 = vmatprep.subr.mxu0 0.0
        %651 = vmatpush2.msra.mxu0 0.0
        %652 = vmatprep.subr.mxu0 0.0
        %653 = vmatpush2.msra.mxu0 0.0
        %654 = vmatprep.subr.mxu0 0.0
        %655 = vmatpush2.msra.mxu0 0.0
        %656 = vmatprep.subr.mxu0 0.0
        %657 = vmatpush2.msra.mxu0 0.0
        %658 = vmatprep.subr.mxu0 0.0
        %659 = vmatpush2.msra.mxu0 0.0
        %660 = vmatprep.subr.mxu0 0.0
        %661 = vmatpush2.msra.mxu0 0.0
        %662 = vmatprep.subr.mxu0 0.0
        %663 = vmatpush2.msra.mxu0 0.0
        %664 = vmatprep.mubr.f32.mxu0 0.0
        %665 = vmatmul.mubr.f32.gmra.mxu0 %v432
        %v666 = vpop.f32.mrf.mxu0
        %v667 = vadd.f32 %v598, %v666
        %v668 = vpop.f32.mrf.mxu0
        %669 = vdwg.mxu0
        %v670 = vld [vmem:[#allocation2] sm:$0xff]
        %v671 = vld [vmem:[#allocation2 + $0x8] sm:$0xff]
        %v672 = vld [vmem:[#allocation2 + $0x10] sm:$0xff]
        %v673 = vld [vmem:[#allocation2 + $0x18] sm:$0xff]
        %v674 = vld [vmem:[#allocation2 + $0x20] sm:$0xff]
        %v675 = vld [vmem:[#allocation2 + $0x28] sm:$0xff]
        %v676 = vld [vmem:[#allocation2 + $0x30] sm:$0xff]
        %v677 = vld [vmem:[#allocation2 + $0x38] sm:$0xff]
        %v678 = vld [vmem:[%s5] sm:$0x1]
        %v680 = vlaneseq
        %v681 = vshrl.u32 %v680, 7
        %v682 = vsub.s32 0, %v681
        %v683 = vrot.slane %v678, %v682
        %vm685 = vcmask 523264
        %v687 = vsel %vm685, %v418, 0
        %689 = vmatprep.subr.mxu0 0.0
        %690 = vmatpush1.msra.mxu0 0.0
        %691 = vmatprep.subr.mxu0 0.0
        %692 = vmatpush1.msra.mxu0 0.0
        %693 = vmatprep.subr.mxu0 0.0
        %694 = vmatpush1.msra.mxu0 0.0
        %695 = vmatprep.subr.mxu0 0.0
        %696 = vmatpush1.msra.mxu0 0.0
        %697 = vmatprep.subr.mxu0 0.0
        %698 = vmatpush1.msra.mxu0 0.0
        %699 = vmatprep.subr.mxu0 0.0
        %700 = vmatpush1.msra.mxu0 0.0
        %701 = vmatprep.subr.mxu0 0.0
        %702 = vmatpush1.msra.mxu0 0.0
        %703 = vmatprep.subr.mxu0 0.0
        %704 = vmatpush1.msra.mxu0 0.0
        %705 = vmatprep.subr.mxu0 0.0
        %706 = vmatpush1.msra.mxu0 %v677
        %707 = vmatprep.subr.mxu0 0.0
        %708 = vmatpush1.msra.mxu0 %v676
        %709 = vmatprep.subr.mxu0 0.0
        %710 = vmatpush1.msra.mxu0 %v675
        %711 = vmatprep.subr.mxu0 0.0
        %712 = vmatpush1.msra.mxu0 %v674
        %713 = vmatprep.subr.mxu0 0.0
        %714 = vmatpush1.msra.mxu0 %v673
        %715 = vmatprep.subr.mxu0 0.0
        %716 = vmatpush1.msra.mxu0 %v672
        %717 = vmatprep.subr.mxu0 0.0
        %718 = vmatpush1.msra.mxu0 %v671
        %719 = vmatprep.subr.mxu0 0.0
        %720 = vmatpush1.msra.mxu0 %v670
        %721 = vmatprep.subr.mxu0 0.0
        %722 = vmatpush2.msra.mxu0 0.0
        %723 = vmatprep.subr.mxu0 0.0
        %724 = vmatpush2.msra.mxu0 0.0
        %725 = vmatprep.subr.mxu0 0.0
        %726 = vmatpush2.msra.mxu0 0.0
        %727 = vmatprep.subr.mxu0 0.0
        %728 = vmatpush2.msra.mxu0 0.0
        %729 = vmatprep.subr.mxu0 0.0
        %730 = vmatpush2.msra.mxu0 0.0
        %731 = vmatprep.subr.mxu0 0.0
        %732 = vmatpush2.msra.mxu0 0.0
        %733 = vmatprep.subr.mxu0 0.0
        %734 = vmatpush2.msra.mxu0 0.0
        %735 = vmatprep.subr.mxu0 0.0
        %736 = vmatpush2.msra.mxu0 0.0
        %737 = vmatprep.subr.mxu0 0.0
        %738 = vmatpush2.msra.mxu0 0.0
        %739 = vmatprep.subr.mxu0 0.0
        %740 = vmatpush2.msra.mxu0 0.0
        %741 = vmatprep.subr.mxu0 0.0
        %742 = vmatpush2.msra.mxu0 0.0
        %743 = vmatprep.subr.mxu0 0.0
        %744 = vmatpush2.msra.mxu0 0.0
        %745 = vmatprep.subr.mxu0 0.0
        %746 = vmatpush2.msra.mxu0 0.0
        %747 = vmatprep.subr.mxu0 0.0
        %748 = vmatpush2.msra.mxu0 0.0
        %749 = vmatprep.subr.mxu0 0.0
        %750 = vmatpush2.msra.mxu0 0.0
        %751 = vmatprep.subr.mxu0 0.0
        %752 = vmatpush2.msra.mxu0 0.0
        %753 = vmatprep.mubr.f32.mxu0 0.0
        %754 = vmatmul.mubr.f32.gmra.mxu0 %v687
        %v755 = vpop.f32.mrf.mxu0
        %v756 = vadd.f32 %v683, %v755
        %v757 = vpop.f32.mrf.mxu0
        %758 = vdwg.mxu0
        %s759 = scalar_lea.vmem [#allocation2], 64
        %v760 = vld [vmem:[%s759] sm:$0xff]
        %v761 = vld [vmem:[%s759 + $0x8] sm:$0xff]
        %v762 = vld [vmem:[%s759 + $0x10] sm:$0xff]
        %v763 = vld [vmem:[%s759 + $0x18] sm:$0xff]
        %v764 = vld [vmem:[%s759 + $0x20] sm:$0xff]
        %v765 = vld [vmem:[%s759 + $0x28] sm:$0xff]
        %v766 = vld [vmem:[%s759 + $0x30] sm:$0xff]
        %v767 = vld [vmem:[%s759 + $0x38] sm:$0xff]
        %s768 = scalar_lea.vmem %s5, 1
        %v769 = vld [vmem:[%s768] sm:$0x1]
        %v771 = vlaneseq
        %v772 = vshrl.u32 %v771, 7
        %v773 = vsub.s32 0, %v772
        %v774 = vrot.slane %v769, %v773
        %776 = vmatprep.subr.mxu0 0.0
        %777 = vmatpush1.msra.mxu0 0.0
        %778 = vmatprep.subr.mxu0 0.0
        %779 = vmatpush1.msra.mxu0 0.0
        %780 = vmatprep.subr.mxu0 0.0
        %781 = vmatpush1.msra.mxu0 0.0
        %782 = vmatprep.subr.mxu0 0.0
        %783 = vmatpush1.msra.mxu0 0.0
        %784 = vmatprep.subr.mxu0 0.0
        %785 = vmatpush1.msra.mxu0 0.0
        %786 = vmatprep.subr.mxu0 0.0
        %787 = vmatpush1.msra.mxu0 0.0
        %788 = vmatprep.subr.mxu0 0.0
        %789 = vmatpush1.msra.mxu0 0.0
        %790 = vmatprep.subr.mxu0 0.0
        %791 = vmatpush1.msra.mxu0 0.0
        %792 = vmatprep.subr.mxu0 0.0
        %793 = vmatpush1.msra.mxu0 %v767
        %794 = vmatprep.subr.mxu0 0.0
        %795 = vmatpush1.msra.mxu0 %v766
        %796 = vmatprep.subr.mxu0 0.0
        %797 = vmatpush1.msra.mxu0 %v765
        %798 = vmatprep.subr.mxu0 0.0
        %799 = vmatpush1.msra.mxu0 %v764
        %800 = vmatprep.subr.mxu0 0.0
        %801 = vmatpush1.msra.mxu0 %v763
        %802 = vmatprep.subr.mxu0 0.0
        %803 = vmatpush1.msra.mxu0 %v762
        %804 = vmatprep.subr.mxu0 0.0
        %805 = vmatpush1.msra.mxu0 %v761
        %806 = vmatprep.subr.mxu0 0.0
        %807 = vmatpush1.msra.mxu0 %v760
        %808 = vmatprep.subr.mxu0 0.0
        %809 = vmatpush2.msra.mxu0 0.0
        %810 = vmatprep.subr.mxu0 0.0
        %811 = vmatpush2.msra.mxu0 0.0
        %812 = vmatprep.subr.mxu0 0.0
        %813 = vmatpush2.msra.mxu0 0.0
        %814 = vmatprep.subr.mxu0 0.0
        %815 = vmatpush2.msra.mxu0 0.0
        %816 = vmatprep.subr.mxu0 0.0
        %817 = vmatpush2.msra.mxu0 0.0
        %818 = vmatprep.subr.mxu0 0.0
        %819 = vmatpush2.msra.mxu0 0.0
        %820 = vmatprep.subr.mxu0 0.0
        %821 = vmatpush2.msra.mxu0 0.0
        %822 = vmatprep.subr.mxu0 0.0
        %823 = vmatpush2.msra.mxu0 0.0
        %824 = vmatprep.subr.mxu0 0.0
        %825 = vmatpush2.msra.mxu0 0.0
        %826 = vmatprep.subr.mxu0 0.0
        %827 = vmatpush2.msra.mxu0 0.0
        %828 = vmatprep.subr.mxu0 0.0
        %829 = vmatpush2.msra.mxu0 0.0
        %830 = vmatprep.subr.mxu0 0.0
        %831 = vmatpush2.msra.mxu0 0.0
        %832 = vmatprep.subr.mxu0 0.0
        %833 = vmatpush2.msra.mxu0 0.0
        %834 = vmatprep.subr.mxu0 0.0
        %835 = vmatpush2.msra.mxu0 0.0
        %836 = vmatprep.subr.mxu0 0.0
        %837 = vmatpush2.msra.mxu0 0.0
        %838 = vmatprep.subr.mxu0 0.0
        %839 = vmatpush2.msra.mxu0 0.0
        %840 = vmatprep.mubr.f32.mxu0 0.0
        %841 = vmatmul.mubr.f32.gmra.mxu0 %v687
        %v842 = vpop.f32.mrf.mxu0
        %v843 = vadd.f32 %v774, %v842
        %v844 = vpop.f32.mrf.mxu0
        %845 = vdwg.mxu0
        %s846 = scalar_lea.vmem [#allocation2], 128
        %v847 = vld [vmem:[%s846] sm:$0xff]
        %v848 = vld [vmem:[%s846 + $0x8] sm:$0xff]
        %v849 = vld [vmem:[%s846 + $0x10] sm:$0xff]
        %v850 = vld [vmem:[%s846 + $0x18] sm:$0xff]
        %v851 = vld [vmem:[%s846 + $0x20] sm:$0xff]
        %v852 = vld [vmem:[%s846 + $0x28] sm:$0xff]
        %v853 = vld [vmem:[%s846 + $0x30] sm:$0xff]
        %v854 = vld [vmem:[%s846 + $0x38] sm:$0xff]
        %s855 = scalar_lea.vmem %s5, 2
        %v856 = vld [vmem:[%s855] sm:$0x1]
        %v858 = vlaneseq
        %v859 = vshrl.u32 %v858, 7
        %v860 = vsub.s32 0, %v859
        %v861 = vrot.slane %v856, %v860
        %863 = vmatprep.subr.mxu0 0.0
        %864 = vmatpush1.msra.mxu0 0.0
        %865 = vmatprep.subr.mxu0 0.0
        %866 = vmatpush1.msra.mxu0 0.0
        %867 = vmatprep.subr.mxu0 0.0
        %868 = vmatpush1.msra.mxu0 0.0
        %869 = vmatprep.subr.mxu0 0.0
        %870 = vmatpush1.msra.mxu0 0.0
        %871 = vmatprep.subr.mxu0 0.0
        %872 = vmatpush1.msra.mxu0 0.0
        %873 = vmatprep.subr.mxu0 0.0
        %874 = vmatpush1.msra.mxu0 0.0
        %875 = vmatprep.subr.mxu0 0.0
        %876 = vmatpush1.msra.mxu0 0.0
        %877 = vmatprep.subr.mxu0 0.0
        %878 = vmatpush1.msra.mxu0 0.0
        %879 = vmatprep.subr.mxu0 0.0
        %880 = vmatpush1.msra.mxu0 %v854
        %881 = vmatprep.subr.mxu0 0.0
        %882 = vmatpush1.msra.mxu0 %v853
        %883 = vmatprep.subr.mxu0 0.0
        %884 = vmatpush1.msra.mxu0 %v852
        %885 = vmatprep.subr.mxu0 0.0
        %886 = vmatpush1.msra.mxu0 %v851
        %887 = vmatprep.subr.mxu0 0.0
        %888 = vmatpush1.msra.mxu0 %v850
        %889 = vmatprep.subr.mxu0 0.0
        %890 = vmatpush1.msra.mxu0 %v849
        %891 = vmatprep.subr.mxu0 0.0
        %892 = vmatpush1.msra.mxu0 %v848
        %893 = vmatprep.subr.mxu0 0.0
        %894 = vmatpush1.msra.mxu0 %v847
        %895 = vmatprep.subr.mxu0 0.0
        %896 = vmatpush2.msra.mxu0 0.0
        %897 = vmatprep.subr.mxu0 0.0
        %898 = vmatpush2.msra.mxu0 0.0
        %899 = vmatprep.subr.mxu0 0.0
        %900 = vmatpush2.msra.mxu0 0.0
        %901 = vmatprep.subr.mxu0 0.0
        %902 = vmatpush2.msra.mxu0 0.0
        %903 = vmatprep.subr.mxu0 0.0
        %904 = vmatpush2.msra.mxu0 0.0
        %905 = vmatprep.subr.mxu0 0.0
        %906 = vmatpush2.msra.mxu0 0.0
        %907 = vmatprep.subr.mxu0 0.0
        %908 = vmatpush2.msra.mxu0 0.0
        %909 = vmatprep.subr.mxu0 0.0
        %910 = vmatpush2.msra.mxu0 0.0
        %911 = vmatprep.subr.mxu0 0.0
        %912 = vmatpush2.msra.mxu0 0.0
        %913 = vmatprep.subr.mxu0 0.0
        %914 = vmatpush2.msra.mxu0 0.0
        %915 = vmatprep.subr.mxu0 0.0
        %916 = vmatpush2.msra.mxu0 0.0
        %917 = vmatprep.subr.mxu0 0.0
        %918 = vmatpush2.msra.mxu0 0.0
        %919 = vmatprep.subr.mxu0 0.0
        %920 = vmatpush2.msra.mxu0 0.0
        %921 = vmatprep.subr.mxu0 0.0
        %922 = vmatpush2.msra.mxu0 0.0
        %923 = vmatprep.subr.mxu0 0.0
        %924 = vmatpush2.msra.mxu0 0.0
        %925 = vmatprep.subr.mxu0 0.0
        %926 = vmatpush2.msra.mxu0 0.0
        %927 = vmatprep.mubr.f32.mxu0 0.0
        %928 = vmatmul.mubr.f32.gmra.mxu0 %v687
        %v929 = vpop.f32.mrf.mxu0
        %v930 = vadd.f32 %v861, %v929
        %v931 = vpop.f32.mrf.mxu0
        %932 = vdwg.mxu0
        %v933 = vadd.f32 %v501, %v756
        %v934 = vxor.u32 %v933, 2147483648
        %v935 = vmul.f32 %v934, 1.442695
        %v936 = vpow.pop %v935
        %v937 = vadd.f32 %v936, 1.0
        %v938 = vrcp.pop %v937
        %v939 = vmul.f32 1.0, %v938
        %v940 = vadd.f32 %v584, %v843
        %v941 = vxor.u32 %v940, 2147483648
        %v942 = vmul.f32 %v941, 1.442695
        %v943 = vpow.pop %v942
        %v944 = vadd.f32 %v943, 1.0
        %v945 = vrcp.pop %v944
        %v946 = vmul.f32 1.0, %v945
        %v947 = vmul.f32 %v939, %v930
        %v948 = vadd.f32 %v667, %v947
        %v949 = vtanh.pop %v948
        %v950 = vsub.f32 1.0, %v946
        %v951 = vmul.f32 %v950, %v949
        %v952 = vmul.f32 %v946, %v418
        %v953 = vadd.f32 %v951, %v952
        %954 = vst.msk [vmem:[#allocation6] sm:$0xff] %vm685, %v953
        %s955 = scalar_lea.vmem [#allocation6], 8
        %v956 = vld [vmem:[%s955] sm:$0xff]
        %s957 = scalar_lea.vmem %s2, 96
        %v958 = vld [vmem:[%s957] sm:$0xff]
        %v959 = vld [vmem:[%s957 + $0x8] sm:$0xff]
        %v960 = vld [vmem:[%s957 + $0x10] sm:$0xff]
        %v961 = vld [vmem:[%s957 + $0x18] sm:$0xff]
        %s962 = scalar_lea.vmem %s4, 3
        %v963 = vld [vmem:[%s962] sm:$0x1]
        %v965 = vlaneseq
        %v966 = vshrl.u32 %v965, 7
        %v967 = vsub.s32 0, %v966
        %v968 = vrot.slane %v963, %v967
        %970 = vmatprep.subr.mxu0 0.0
        %971 = vmatpush1.msra.mxu0 0.0
        %972 = vmatprep.subr.mxu0 0.0
        %973 = vmatpush1.msra.mxu0 0.0
        %974 = vmatprep.subr.mxu0 0.0
        %975 = vmatpush1.msra.mxu0 0.0
        %976 = vmatprep.subr.mxu0 0.0
        %977 = vmatpush1.msra.mxu0 0.0
        %978 = vmatprep.subr.mxu0 0.0
        %979 = vmatpush1.msra.mxu0 0.0
        %980 = vmatprep.subr.mxu0 0.0
        %981 = vmatpush1.msra.mxu0 0.0
        %982 = vmatprep.subr.mxu0 0.0
        %983 = vmatpush1.msra.mxu0 0.0
        %984 = vmatprep.subr.mxu0 0.0
        %985 = vmatpush1.msra.mxu0 0.0
        %986 = vmatprep.subr.mxu0 0.0
        %987 = vmatpush1.msra.mxu0 0.0
        %988 = vmatprep.subr.mxu0 0.0
        %989 = vmatpush1.msra.mxu0 0.0
        %990 = vmatprep.subr.mxu0 0.0
        %991 = vmatpush1.msra.mxu0 0.0
        %992 = vmatprep.subr.mxu0 0.0
        %993 = vmatpush1.msra.mxu0 0.0
        %994 = vmatprep.subr.mxu0 0.0
        %995 = vmatpush1.msra.mxu0 %v961
        %996 = vmatprep.subr.mxu0 0.0
        %997 = vmatpush1.msra.mxu0 %v960
        %998 = vmatprep.subr.mxu0 0.0
        %999 = vmatpush1.msra.mxu0 %v959
        %1000 = vmatprep.subr.mxu0 0.0
        %1001 = vmatpush1.msra.mxu0 %v958
        %1002 = vmatprep.subr.mxu0 0.0
        %1003 = vmatpush2.msra.mxu0 0.0
        %1004 = vmatprep.subr.mxu0 0.0
        %1005 = vmatpush2.msra.mxu0 0.0
        %1006 = vmatprep.subr.mxu0 0.0
        %1007 = vmatpush2.msra.mxu0 0.0
        %1008 = vmatprep.subr.mxu0 0.0
        %1009 = vmatpush2.msra.mxu0 0.0
        %1010 = vmatprep.subr.mxu0 0.0
        %1011 = vmatpush2.msra.mxu0 0.0
        %1012 = vmatprep.subr.mxu0 0.0
        %1013 = vmatpush2.msra.mxu0 0.0
        %1014 = vmatprep.subr.mxu0 0.0
        %1015 = vmatpush2.msra.mxu0 0.0
        %1016 = vmatprep.subr.mxu0 0.0
        %1017 = vmatpush2.msra.mxu0 0.0
        %1018 = vmatprep.subr.mxu0 0.0
        %1019 = vmatpush2.msra.mxu0 0.0
        %1020 = vmatprep.subr.mxu0 0.0
        %1021 = vmatpush2.msra.mxu0 0.0
        %1022 = vmatprep.subr.mxu0 0.0
        %1023 = vmatpush2.msra.mxu0 0.0
        %1024 = vmatprep.subr.mxu0 0.0
        %1025 = vmatpush2.msra.mxu0 0.0
        %1026 = vmatprep.subr.mxu0 0.0
        %1027 = vmatpush2.msra.mxu0 0.0
        %1028 = vmatprep.subr.mxu0 0.0
        %1029 = vmatpush2.msra.mxu0 0.0
        %1030 = vmatprep.subr.mxu0 0.0
        %1031 = vmatpush2.msra.mxu0 0.0
        %1032 = vmatprep.subr.mxu0 0.0
        %1033 = vmatpush2.msra.mxu0 0.0
        %1034 = vmatprep.mubr.f32.mxu0 0.0
        %1035 = vmatmul.mubr.f32.gmra.mxu0 %v432
        %v1036 = vpop.f32.mrf.mxu0
        %v1037 = vadd.f32 %v968, %v1036
        %v1038 = vpop.f32.mrf.mxu0
        %1039 = vdwg.mxu0
        %s1040 = scalar_lea.vmem %s2, 128
        %v1041 = vld [vmem:[%s1040] sm:$0xff]
        %v1042 = vld [vmem:[%s1040 + $0x8] sm:$0xff]
        %v1043 = vld [vmem:[%s1040 + $0x10] sm:$0xff]
        %v1044 = vld [vmem:[%s1040 + $0x18] sm:$0xff]
        %s1045 = scalar_lea.vmem %s4, 4
        %v1046 = vld [vmem:[%s1045] sm:$0x1]
        %v1048 = vlaneseq
        %v1049 = vshrl.u32 %v1048, 7
        %v1050 = vsub.s32 0, %v1049
        %v1051 = vrot.slane %v1046, %v1050
        %1053 = vmatprep.subr.mxu0 0.0
        %1054 = vmatpush1.msra.mxu0 0.0
        %1055 = vmatprep.subr.mxu0 0.0
        %1056 = vmatpush1.msra.mxu0 0.0
        %1057 = vmatprep.subr.mxu0 0.0
        %1058 = vmatpush1.msra.mxu0 0.0
        %1059 = vmatprep.subr.mxu0 0.0
        %1060 = vmatpush1.msra.mxu0 0.0
        %1061 = vmatprep.subr.mxu0 0.0
        %1062 = vmatpush1.msra.mxu0 0.0
        %1063 = vmatprep.subr.mxu0 0.0
        %1064 = vmatpush1.msra.mxu0 0.0
        %1065 = vmatprep.subr.mxu0 0.0
        %1066 = vmatpush1.msra.mxu0 0.0
        %1067 = vmatprep.subr.mxu0 0.0
        %1068 = vmatpush1.msra.mxu0 0.0
        %1069 = vmatprep.subr.mxu0 0.0
        %1070 = vmatpush1.msra.mxu0 0.0
        %1071 = vmatprep.subr.mxu0 0.0
        %1072 = vmatpush1.msra.mxu0 0.0
        %1073 = vmatprep.subr.mxu0 0.0
        %1074 = vmatpush1.msra.mxu0 0.0
        %1075 = vmatprep.subr.mxu0 0.0
        %1076 = vmatpush1.msra.mxu0 0.0
        %1077 = vmatprep.subr.mxu0 0.0
        %1078 = vmatpush1.msra.mxu0 %v1044
        %1079 = vmatprep.subr.mxu0 0.0
        %1080 = vmatpush1.msra.mxu0 %v1043
        %1081 = vmatprep.subr.mxu0 0.0
        %1082 = vmatpush1.msra.mxu0 %v1042
        %1083 = vmatprep.subr.mxu0 0.0
        %1084 = vmatpush1.msra.mxu0 %v1041
        %1085 = vmatprep.subr.mxu0 0.0
        %1086 = vmatpush2.msra.mxu0 0.0
        %1087 = vmatprep.subr.mxu0 0.0
        %1088 = vmatpush2.msra.mxu0 0.0
        %1089 = vmatprep.subr.mxu0 0.0
        %1090 = vmatpush2.msra.mxu0 0.0
        %1091 = vmatprep.subr.mxu0 0.0
        %1092 = vmatpush2.msra.mxu0 0.0
        %1093 = vmatprep.subr.mxu0 0.0
        %1094 = vmatpush2.msra.mxu0 0.0
        %1095 = vmatprep.subr.mxu0 0.0
        %1096 = vmatpush2.msra.mxu0 0.0
        %1097 = vmatprep.subr.mxu0 0.0
        %1098 = vmatpush2.msra.mxu0 0.0
        %1099 = vmatprep.subr.mxu0 0.0
        %1100 = vmatpush2.msra.mxu0 0.0
        %1101 = vmatprep.subr.mxu0 0.0
        %1102 = vmatpush2.msra.mxu0 0.0
        %1103 = vmatprep.subr.mxu0 0.0
        %1104 = vmatpush2.msra.mxu0 0.0
        %1105 = vmatprep.subr.mxu0 0.0
        %1106 = vmatpush2.msra.mxu0 0.0
        %1107 = vmatprep.subr.mxu0 0.0
        %1108 = vmatpush2.msra.mxu0 0.0
        %1109 = vmatprep.subr.mxu0 0.0
        %1110 = vmatpush2.msra.mxu0 0.0
        %1111 = vmatprep.subr.mxu0 0.0
        %1112 = vmatpush2.msra.mxu0 0.0
        %1113 = vmatprep.subr.mxu0 0.0
        %1114 = vmatpush2.msra.mxu0 0.0
        %1115 = vmatprep.subr.mxu0 0.0
        %1116 = vmatpush2.msra.mxu0 0.0
        %1117 = vmatprep.mubr.f32.mxu0 0.0
        %1118 = vmatmul.mubr.f32.gmra.mxu0 %v432
        %v1119 = vpop.f32.mrf.mxu0
        %v1120 = vadd.f32 %v1051, %v1119
        %v1121 = vpop.f32.mrf.mxu0
        %1122 = vdwg.mxu0
        %s1123 = scalar_lea.vmem %s2, 160
        %v1124 = vld [vmem:[%s1123] sm:$0xff]
        %v1125 = vld [vmem:[%s1123 + $0x8] sm:$0xff]
        %v1126 = vld [vmem:[%s1123 + $0x10] sm:$0xff]
        %v1127 = vld [vmem:[%s1123 + $0x18] sm:$0xff]
        %s1128 = scalar_lea.vmem %s4, 5
        %v1129 = vld [vmem:[%s1128] sm:$0x1]
        %v1131 = vlaneseq
        %v1132 = vshrl.u32 %v1131, 7
        %v1133 = vsub.s32 0, %v1132
        %v1134 = vrot.slane %v1129, %v1133
        %1136 = vmatprep.subr.mxu0 0.0
        %1137 = vmatpush1.msra.mxu0 0.0
        %1138 = vmatprep.subr.mxu0 0.0
        %1139 = vmatpush1.msra.mxu0 0.0
        %1140 = vmatprep.subr.mxu0 0.0
        %1141 = vmatpush1.msra.mxu0 0.0
        %1142 = vmatprep.subr.mxu0 0.0
        %1143 = vmatpush1.msra.mxu0 0.0
        %1144 = vmatprep.subr.mxu0 0.0
        %1145 = vmatpush1.msra.mxu0 0.0
        %1146 = vmatprep.subr.mxu0 0.0
        %1147 = vmatpush1.msra.mxu0 0.0
        %1148 = vmatprep.subr.mxu0 0.0
        %1149 = vmatpush1.msra.mxu0 0.0
        %1150 = vmatprep.subr.mxu0 0.0
        %1151 = vmatpush1.msra.mxu0 0.0
        %1152 = vmatprep.subr.mxu0 0.0
        %1153 = vmatpush1.msra.mxu0 0.0
        %1154 = vmatprep.subr.mxu0 0.0
        %1155 = vmatpush1.msra.mxu0 0.0
        %1156 = vmatprep.subr.mxu0 0.0
        %1157 = vmatpush1.msra.mxu0 0.0
        %1158 = vmatprep.subr.mxu0 0.0
        %1159 = vmatpush1.msra.mxu0 0.0
        %1160 = vmatprep.subr.mxu0 0.0
        %1161 = vmatpush1.msra.mxu0 %v1127
        %1162 = vmatprep.subr.mxu0 0.0
        %1163 = vmatpush1.msra.mxu0 %v1126
        %1164 = vmatprep.subr.mxu0 0.0
        %1165 = vmatpush1.msra.mxu0 %v1125
        %1166 = vmatprep.subr.mxu0 0.0
        %1167 = vmatpush1.msra.mxu0 %v1124
        %1168 = vmatprep.subr.mxu0 0.0
        %1169 = vmatpush2.msra.mxu0 0.0
        %1170 = vmatprep.subr.mxu0 0.0
        %1171 = vmatpush2.msra.mxu0 0.0
        %1172 = vmatprep.subr.mxu0 0.0
        %1173 = vmatpush2.msra.mxu0 0.0
        %1174 = vmatprep.subr.mxu0 0.0
        %1175 = vmatpush2.msra.mxu0 0.0
        %1176 = vmatprep.subr.mxu0 0.0
        %1177 = vmatpush2.msra.mxu0 0.0
        %1178 = vmatprep.subr.mxu0 0.0
        %1179 = vmatpush2.msra.mxu0 0.0
        %1180 = vmatprep.subr.mxu0 0.0
        %1181 = vmatpush2.msra.mxu0 0.0
        %1182 = vmatprep.subr.mxu0 0.0
        %1183 = vmatpush2.msra.mxu0 0.0
        %1184 = vmatprep.subr.mxu0 0.0
        %1185 = vmatpush2.msra.mxu0 0.0
        %1186 = vmatprep.subr.mxu0 0.0
        %1187 = vmatpush2.msra.mxu0 0.0
        %1188 = vmatprep.subr.mxu0 0.0
        %1189 = vmatpush2.msra.mxu0 0.0
        %1190 = vmatprep.subr.mxu0 0.0
        %1191 = vmatpush2.msra.mxu0 0.0
        %1192 = vmatprep.subr.mxu0 0.0
        %1193 = vmatpush2.msra.mxu0 0.0
        %1194 = vmatprep.subr.mxu0 0.0
        %1195 = vmatpush2.msra.mxu0 0.0
        %1196 = vmatprep.subr.mxu0 0.0
        %1197 = vmatpush2.msra.mxu0 0.0
        %1198 = vmatprep.subr.mxu0 0.0
        %1199 = vmatpush2.msra.mxu0 0.0
        %1200 = vmatprep.mubr.f32.mxu0 0.0
        %1201 = vmatmul.mubr.f32.gmra.mxu0 %v432
        %v1202 = vpop.f32.mrf.mxu0
        %v1203 = vadd.f32 %v1134, %v1202
        %v1204 = vpop.f32.mrf.mxu0
        %1205 = vdwg.mxu0
        %s1206 = scalar_lea.vmem [#allocation2], 192
        %v1207 = vld [vmem:[%s1206] sm:$0xff]
        %v1208 = vld [vmem:[%s1206 + $0x8] sm:$0xff]
        %v1209 = vld [vmem:[%s1206 + $0x10] sm:$0xff]
        %v1210 = vld [vmem:[%s1206 + $0x18] sm:$0xff]
        %v1211 = vld [vmem:[%s1206 + $0x20] sm:$0xff]
        %v1212 = vld [vmem:[%s1206 + $0x28] sm:$0xff]
        %v1213 = vld [vmem:[%s1206 + $0x30] sm:$0xff]
        %v1214 = vld [vmem:[%s1206 + $0x38] sm:$0xff]
        %s1215 = scalar_lea.vmem %s5, 3
        %v1216 = vld [vmem:[%s1215] sm:$0x1]
        %v1218 = vlaneseq
        %v1219 = vshrl.u32 %v1218, 7
        %v1220 = vsub.s32 0, %v1219
        %v1221 = vrot.slane %v1216, %v1220
        %v1224 = vsel %vm685, %v956, 0
        %1226 = vmatprep.subr.mxu0 0.0
        %1227 = vmatpush1.msra.mxu0 0.0
        %1228 = vmatprep.subr.mxu0 0.0
        %1229 = vmatpush1.msra.mxu0 0.0
        %1230 = vmatprep.subr.mxu0 0.0
        %1231 = vmatpush1.msra.mxu0 0.0
        %1232 = vmatprep.subr.mxu0 0.0
        %1233 = vmatpush1.msra.mxu0 0.0
        %1234 = vmatprep.subr.mxu0 0.0
        %1235 = vmatpush1.msra.mxu0 0.0
        %1236 = vmatprep.subr.mxu0 0.0
        %1237 = vmatpush1.msra.mxu0 0.0
        %1238 = vmatprep.subr.mxu0 0.0
        %1239 = vmatpush1.msra.mxu0 0.0
        %1240 = vmatprep.subr.mxu0 0.0
        %1241 = vmatpush1.msra.mxu0 0.0
        %1242 = vmatprep.subr.mxu0 0.0
        %1243 = vmatpush1.msra.mxu0 %v1214
        %1244 = vmatprep.subr.mxu0 0.0
        %1245 = vmatpush1.msra.mxu0 %v1213
        %1246 = vmatprep.subr.mxu0 0.0
        %1247 = vmatpush1.msra.mxu0 %v1212
        %1248 = vmatprep.subr.mxu0 0.0
        %1249 = vmatpush1.msra.mxu0 %v1211
        %1250 = vmatprep.subr.mxu0 0.0
        %1251 = vmatpush1.msra.mxu0 %v1210
        %1252 = vmatprep.subr.mxu0 0.0
        %1253 = vmatpush1.msra.mxu0 %v1209
        %1254 = vmatprep.subr.mxu0 0.0
        %1255 = vmatpush1.msra.mxu0 %v1208
        %1256 = vmatprep.subr.mxu0 0.0
        %1257 = vmatpush1.msra.mxu0 %v1207
        %1258 = vmatprep.subr.mxu0 0.0
        %1259 = vmatpush2.msra.mxu0 0.0
        %1260 = vmatprep.subr.mxu0 0.0
        %1261 = vmatpush2.msra.mxu0 0.0
        %1262 = vmatprep.subr.mxu0 0.0
        %1263 = vmatpush2.msra.mxu0 0.0
        %1264 = vmatprep.subr.mxu0 0.0
        %1265 = vmatpush2.msra.mxu0 0.0
        %1266 = vmatprep.subr.mxu0 0.0
        %1267 = vmatpush2.msra.mxu0 0.0
        %1268 = vmatprep.subr.mxu0 0.0
        %1269 = vmatpush2.msra.mxu0 0.0
        %1270 = vmatprep.subr.mxu0 0.0
        %1271 = vmatpush2.msra.mxu0 0.0
        %1272 = vmatprep.subr.mxu0 0.0
        %1273 = vmatpush2.msra.mxu0 0.0
        %1274 = vmatprep.subr.mxu0 0.0
        %1275 = vmatpush2.msra.mxu0 0.0
        %1276 = vmatprep.subr.mxu0 0.0
        %1277 = vmatpush2.msra.mxu0 0.0
        %1278 = vmatprep.subr.mxu0 0.0
        %1279 = vmatpush2.msra.mxu0 0.0
        %1280 = vmatprep.subr.mxu0 0.0
        %1281 = vmatpush2.msra.mxu0 0.0
        %1282 = vmatprep.subr.mxu0 0.0
        %1283 = vmatpush2.msra.mxu0 0.0
        %1284 = vmatprep.subr.mxu0 0.0
        %1285 = vmatpush2.msra.mxu0 0.0
        %1286 = vmatprep.subr.mxu0 0.0
        %1287 = vmatpush2.msra.mxu0 0.0
        %1288 = vmatprep.subr.mxu0 0.0
        %1289 = vmatpush2.msra.mxu0 0.0
        %1290 = vmatprep.mubr.f32.mxu0 0.0
        %1291 = vmatmul.mubr.f32.gmra.mxu0 %v1224
        %v1292 = vpop.f32.mrf.mxu0
        %v1293 = vadd.f32 %v1221, %v1292
        %v1294 = vpop.f32.mrf.mxu0
        %1295 = vdwg.mxu0
        %s1296 = scalar_lea.vmem [#allocation2], 256
        %v1297 = vld [vmem:[%s1296] sm:$0xff]
        %v1298 = vld [vmem:[%s1296 + $0x8] sm:$0xff]
        %v1299 = vld [vmem:[%s1296 + $0x10] sm:$0xff]
        %v1300 = vld [vmem:[%s1296 + $0x18] sm:$0xff]
        %v1301 = vld [vmem:[%s1296 + $0x20] sm:$0xff]
        %v1302 = vld [vmem:[%s1296 + $0x28] sm:$0xff]
        %v1303 = vld [vmem:[%s1296 + $0x30] sm:$0xff]
        %v1304 = vld [vmem:[%s1296 + $0x38] sm:$0xff]
        %s1305 = scalar_lea.vmem %s5, 4
        %v1306 = vld [vmem:[%s1305] sm:$0x1]
        %v1308 = vlaneseq
        %v1309 = vshrl.u32 %v1308, 7
        %v1310 = vsub.s32 0, %v1309
        %v1311 = vrot.slane %v1306, %v1310
        %1313 = vmatprep.subr.mxu0 0.0
        %1314 = vmatpush1.msra.mxu0 0.0
        %1315 = vmatprep.subr.mxu0 0.0
        %1316 = vmatpush1.msra.mxu0 0.0
        %1317 = vmatprep.subr.mxu0 0.0
        %1318 = vmatpush1.msra.mxu0 0.0
        %1319 = vmatprep.subr.mxu0 0.0
        %1320 = vmatpush1.msra.mxu0 0.0
        %1321 = vmatprep.subr.mxu0 0.0
        %1322 = vmatpush1.msra.mxu0 0.0
        %1323 = vmatprep.subr.mxu0 0.0
        %1324 = vmatpush1.msra.mxu0 0.0
        %1325 = vmatprep.subr.mxu0 0.0
        %1326 = vmatpush1.msra.mxu0 0.0
        %1327 = vmatprep.subr.mxu0 0.0
        %1328 = vmatpush1.msra.mxu0 0.0
        %1329 = vmatprep.subr.mxu0 0.0
        %1330 = vmatpush1.msra.mxu0 %v1304
        %1331 = vmatprep.subr.mxu0 0.0
        %1332 = vmatpush1.msra.mxu0 %v1303
        %1333 = vmatprep.subr.mxu0 0.0
        %1334 = vmatpush1.msra.mxu0 %v1302
        %1335 = vmatprep.subr.mxu0 0.0
        %1336 = vmatpush1.msra.mxu0 %v1301
        %1337 = vmatprep.subr.mxu0 0.0
        %1338 = vmatpush1.msra.mxu0 %v1300
        %1339 = vmatprep.subr.mxu0 0.0
        %1340 = vmatpush1.msra.mxu0 %v1299
        %1341 = vmatprep.subr.mxu0 0.0
        %1342 = vmatpush1.msra.mxu0 %v1298
        %1343 = vmatprep.subr.mxu0 0.0
        %1344 = vmatpush1.msra.mxu0 %v1297
        %1345 = vmatprep.subr.mxu0 0.0
        %1346 = vmatpush2.msra.mxu0 0.0
        %1347 = vmatprep.subr.mxu0 0.0
        %1348 = vmatpush2.msra.mxu0 0.0
        %1349 = vmatprep.subr.mxu0 0.0
        %1350 = vmatpush2.msra.mxu0 0.0
        %1351 = vmatprep.subr.mxu0 0.0
        %1352 = vmatpush2.msra.mxu0 0.0
        %1353 = vmatprep.subr.mxu0 0.0
        %1354 = vmatpush2.msra.mxu0 0.0
        %1355 = vmatprep.subr.mxu0 0.0
        %1356 = vmatpush2.msra.mxu0 0.0
        %1357 = vmatprep.subr.mxu0 0.0
        %1358 = vmatpush2.msra.mxu0 0.0
        %1359 = vmatprep.subr.mxu0 0.0
        %1360 = vmatpush2.msra.mxu0 0.0
        %1361 = vmatprep.subr.mxu0 0.0
        %1362 = vmatpush2.msra.mxu0 0.0
        %1363 = vmatprep.subr.mxu0 0.0
        %1364 = vmatpush2.msra.mxu0 0.0
        %1365 = vmatprep.subr.mxu0 0.0
        %1366 = vmatpush2.msra.mxu0 0.0
        %1367 = vmatprep.subr.mxu0 0.0
        %1368 = vmatpush2.msra.mxu0 0.0
        %1369 = vmatprep.subr.mxu0 0.0
        %1370 = vmatpush2.msra.mxu0 0.0
        %1371 = vmatprep.subr.mxu0 0.0
        %1372 = vmatpush2.msra.mxu0 0.0
        %1373 = vmatprep.subr.mxu0 0.0
        %1374 = vmatpush2.msra.mxu0 0.0
        %1375 = vmatprep.subr.mxu0 0.0
        %1376 = vmatpush2.msra.mxu0 0.0
        %1377 = vmatprep.mubr.f32.mxu0 0.0
        %1378 = vmatmul.mubr.f32.gmra.mxu0 %v1224
        %v1379 = vpop.f32.mrf.mxu0
        %v1380 = vadd.f32 %v1311, %v1379
        %v1381 = vpop.f32.mrf.mxu0
        %1382 = vdwg.mxu0
        %s1383 = scalar_lea.vmem [#allocation2], 320
        %v1384 = vld [vmem:[%s1383] sm:$0xff]
        %v1385 = vld [vmem:[%s1383 + $0x8] sm:$0xff]
        %v1386 = vld [vmem:[%s1383 + $0x10] sm:$0xff]
        %v1387 = vld [vmem:[%s1383 + $0x18] sm:$0xff]
        %v1388 = vld [vmem:[%s1383 + $0x20] sm:$0xff]
        %v1389 = vld [vmem:[%s1383 + $0x28] sm:$0xff]
        %v1390 = vld [vmem:[%s1383 + $0x30] sm:$0xff]
        %v1391 = vld [vmem:[%s1383 + $0x38] sm:$0xff]
        %s1392 = scalar_lea.vmem %s5, 5
        %v1393 = vld [vmem:[%s1392] sm:$0x1]
        %v1395 = vlaneseq
        %v1396 = vshrl.u32 %v1395, 7
        %v1397 = vsub.s32 0, %v1396
        %v1398 = vrot.slane %v1393, %v1397
        %1400 = vmatprep.subr.mxu0 0.0
        %1401 = vmatpush1.msra.mxu0 0.0
        %1402 = vmatprep.subr.mxu0 0.0
        %1403 = vmatpush1.msra.mxu0 0.0
        %1404 = vmatprep.subr.mxu0 0.0
        %1405 = vmatpush1.msra.mxu0 0.0
        %1406 = vmatprep.subr.mxu0 0.0
        %1407 = vmatpush1.msra.mxu0 0.0
        %1408 = vmatprep.subr.mxu0 0.0
        %1409 = vmatpush1.msra.mxu0 0.0
        %1410 = vmatprep.subr.mxu0 0.0
        %1411 = vmatpush1.msra.mxu0 0.0
        %1412 = vmatprep.subr.mxu0 0.0
        %1413 = vmatpush1.msra.mxu0 0.0
        %1414 = vmatprep.subr.mxu0 0.0
        %1415 = vmatpush1.msra.mxu0 0.0
        %1416 = vmatprep.subr.mxu0 0.0
        %1417 = vmatpush1.msra.mxu0 %v1391
        %1418 = vmatprep.subr.mxu0 0.0
        %1419 = vmatpush1.msra.mxu0 %v1390
        %1420 = vmatprep.subr.mxu0 0.0
        %1421 = vmatpush1.msra.mxu0 %v1389
        %1422 = vmatprep.subr.mxu0 0.0
        %1423 = vmatpush1.msra.mxu0 %v1388
        %1424 = vmatprep.subr.mxu0 0.0
        %1425 = vmatpush1.msra.mxu0 %v1387
        %1426 = vmatprep.subr.mxu0 0.0
        %1427 = vmatpush1.msra.mxu0 %v1386
        %1428 = vmatprep.subr.mxu0 0.0
        %1429 = vmatpush1.msra.mxu0 %v1385
        %1430 = vmatprep.subr.mxu0 0.0
        %1431 = vmatpush1.msra.mxu0 %v1384
        %1432 = vmatprep.subr.mxu0 0.0
        %1433 = vmatpush2.msra.mxu0 0.0
        %1434 = vmatprep.subr.mxu0 0.0
        %1435 = vmatpush2.msra.mxu0 0.0
        %1436 = vmatprep.subr.mxu0 0.0
        %1437 = vmatpush2.msra.mxu0 0.0
        %1438 = vmatprep.subr.mxu0 0.0
        %1439 = vmatpush2.msra.mxu0 0.0
        %1440 = vmatprep.subr.mxu0 0.0
        %1441 = vmatpush2.msra.mxu0 0.0
        %1442 = vmatprep.subr.mxu0 0.0
        %1443 = vmatpush2.msra.mxu0 0.0
        %1444 = vmatprep.subr.mxu0 0.0
        %1445 = vmatpush2.msra.mxu0 0.0
        %1446 = vmatprep.subr.mxu0 0.0
        %1447 = vmatpush2.msra.mxu0 0.0
        %1448 = vmatprep.subr.mxu0 0.0
        %1449 = vmatpush2.msra.mxu0 0.0
        %1450 = vmatprep.subr.mxu0 0.0
        %1451 = vmatpush2.msra.mxu0 0.0
        %1452 = vmatprep.subr.mxu0 0.0
        %1453 = vmatpush2.msra.mxu0 0.0
        %1454 = vmatprep.subr.mxu0 0.0
        %1455 = vmatpush2.msra.mxu0 0.0
        %1456 = vmatprep.subr.mxu0 0.0
        %1457 = vmatpush2.msra.mxu0 0.0
        %1458 = vmatprep.subr.mxu0 0.0
        %1459 = vmatpush2.msra.mxu0 0.0
        %1460 = vmatprep.subr.mxu0 0.0
        %1461 = vmatpush2.msra.mxu0 0.0
        %1462 = vmatprep.subr.mxu0 0.0
        %1463 = vmatpush2.msra.mxu0 0.0
        %1464 = vmatprep.mubr.f32.mxu0 0.0
        %1465 = vmatmul.mubr.f32.gmra.mxu0 %v1224
        %v1466 = vpop.f32.mrf.mxu0
        %v1467 = vadd.f32 %v1398, %v1466
        %v1468 = vpop.f32.mrf.mxu0
        %1469 = vdwg.mxu0
        %v1470 = vadd.f32 %v1037, %v1293
        %v1471 = vxor.u32 %v1470, 2147483648
        %v1472 = vmul.f32 %v1471, 1.442695
        %v1473 = vpow.pop %v1472
        %v1474 = vadd.f32 %v1473, 1.0
        %v1475 = vrcp.pop %v1474
        %v1476 = vmul.f32 1.0, %v1475
        %v1477 = vadd.f32 %v1120, %v1380
        %v1478 = vxor.u32 %v1477, 2147483648
        %v1479 = vmul.f32 %v1478, 1.442695
        %v1480 = vpow.pop %v1479
        %v1481 = vadd.f32 %v1480, 1.0
        %v1482 = vrcp.pop %v1481
        %v1483 = vmul.f32 1.0, %v1482
        %v1484 = vmul.f32 %v1476, %v1467
        %v1485 = vadd.f32 %v1203, %v1484
        %v1486 = vtanh.pop %v1485
        %v1487 = vsub.f32 1.0, %v1483
        %v1488 = vmul.f32 %v1487, %v1486
        %v1489 = vmul.f32 %v1483, %v956
        %v1490 = vadd.f32 %v1488, %v1489
        %1491 = vst.msk [vmem:[%s955] sm:$0xff] %vm685, %v1490
        %1493 = vrot.lane.b32.xlu0 %v1490, 64
        %v1494 = vpop.permute.xlu0 %1493
        %v1496 = vsel %vm685, %v953, %v1494
        %1497 = vst [vmem:[%s308] sm:$0xff] %v1496
        %s1498 = sand.u32 %s185, 1
        %s1499 = scalar_lea.sflag [#allocation4], %s1498
        %s1500 = sand.u32 %s185, 1
        %s1501 = smul.addr %s1500, 8
        %s1502 = scalar_lea.vmem [#allocation5], %s1501
        // Predicated region
        $region57: #{tpu_custom_call.1} parent=47 // pred_check
          %p1503 = pneg %p195
        $region58: #{tpu_custom_call.1} parent=47 // pred_check_branch
          %1505 = sbr.rel (%p1503) target = $region60
        $region59: #{tpu_custom_call.1} parent=47 // pred_region
          %s1507 = ssub.s32 128, 128
          %1508 = vsyncadd %s1499, %s1507
          %s1509 = smul.addr %s25, 128
          %s1510 = scalar_lea.hbm %s7, %s1509
          %s1512 = sshll.u32 %s1502, 4
          %s1513 = int_to_ptr.vmem [resolvable:$true] %s1512
          %1515 = dma.vmem_to_hbm [thread:$0]  %s1513, 128, %s1510, %s1499
        $region60: #{tpu_custom_call.1} parent=47 // pred_fallthru
          _
        // Predicated region
        $region61: #{tpu_custom_call.1} parent=47 // pred_check
          %p1516 = pneg %p216
        $region62: #{tpu_custom_call.1} parent=47 // pred_check_branch
          %1518 = sbr.rel (%p1516) target = $region64
        $region63: #{tpu_custom_call.1} parent=47 // pred_region
          %s1520 = ssub.s32 256, 256
          %1521 = vsyncadd [#allocation7], %s1520
          %s1522 = sshll.u32 [#allocation6], 4
          %s1523 = int_to_ptr.vmem [resolvable:$true] %s1522
          %1528 = dma.vmem_to_hbm [thread:$0]  %s1523, 256, %s8, [#allocation7], 128, 128, 8
        $region64: #{tpu_custom_call.1} parent=47 // pred_fallthru
          _
        // Predicated region
        $region65: #{tpu_custom_call.1} parent=47 // pred_check
          %p1529 = pneg %p216
        $region66: #{tpu_custom_call.1} parent=47 // pred_check_branch
          %1531 = sbr.rel (%p1529) target = $region68
        $region67: #{tpu_custom_call.1} parent=47 // pred_region
          %1532 = dma.done [#allocation7], 256
        $region68: #{tpu_custom_call.1} parent=47 // pred_fallthru
          _
      $region48: #{tpu_custom_call.1} parent=5 // pred_fallthru
        _
      %p1533 = scmp.le.s32.totalorder 2, %s20
      // Predicated region
      $region69: #{tpu_custom_call.1} parent=5 // pred_check
        %p1534 = pneg %p1533
      $region70: #{tpu_custom_call.1} parent=5 // pred_check_branch
        %1536 = sbr.rel (%p1534) target = $region72
      $region71: #{tpu_custom_call.1} parent=5 // pred_region
        %s1537 = ssub.s32 %s20, 2
        // Predicated region
        $region73: #{tpu_custom_call.1} parent=71 // pred_check
          %p1538 = pneg %p201
        $region74: #{tpu_custom_call.1} parent=71 // pred_check_branch
          %1540 = sbr.rel (%p1538) target = $region76
        $region75: #{tpu_custom_call.1} parent=71 // pred_region
          %s1541 = sand.u32 %s186, 1
          %s1542 = scalar_lea.sflag [#allocation4], %s1541
          %s1543 = sand.u32 %s186, 1
          %s1544 = smul.addr %s1543, 8
          %s1545 = scalar_lea.vmem [#allocation5], %s1544
          %1546 = dma.done %s1542, 128
        $region76: #{tpu_custom_call.1} parent=71 // pred_fallthru
          _
      $region72: #{tpu_custom_call.1} parent=5 // pred_fallthru
        _
    $region6: #{tpu_custom_call.1} parent=1 // loop_footer
      %s24 = sadd.s32 1, %s20
    $region7: #{tpu_custom_call.1} parent=1 // loop_footer_branch
      %19 = sbr.rel target = $region3
    $region8: #{tpu_custom_call.1} parent=1 // loop_exit
      _
    %1547 = vsyncpa [#allocation3], 1
    %s1548 = scalar_lea.sflag [#allocation3], 1
    %1549 = vsyncpa %s1548, 1
    %1550 = vsyncpa [#allocation4], 1
    %s1551 = scalar_lea.sflag [#allocation4], 1
    %1552 = vsyncpa %s1551, 1
    %1553 = vsyncpa [#allocation7], 1

</llo_original>
